<compile_context>
chip_gen: v7x
topology: tpu7x:2x2x1
jax: 0.10.0
libtpu: 0.0.40
codegen_flags: <defaults>
</compile_context>

<pallas_src>
import functools

import jax
import jax.numpy as jnp
from jax import lax
from jax.experimental import pallas as pl
from jax.experimental.pallas import tpu as pltpu


def _round_up(x, m):
    return (x + m - 1) // m * m


def _tpu_vmem_capacity():
    try:
        return int(pltpu.get_tpu_info().vmem_capacity_bytes)
    except Exception:
        # Conservative (v7x-sized) fallback if the query is unavailable.
        return 64 * 1024 * 1024


def _default_tile_m():
    # 128-MiB-VMEM parts (v5e/v6e) -> 512 rows; 64-MiB parts (v7x) -> 256 rows.
    return 512 if _tpu_vmem_capacity() >= 100 * 1024 * 1024 else 256


def _layer_step(x, w, b_row, compute_dtype):
    acc = jnp.dot(x, w, preferred_element_type=jnp.float32)   # MXU, f32 accumulation
    acc = acc + b_row                                          # (1, H) f32 bias row
    acc = jnp.maximum(acc, 0.0)                                # ReLU on VPU (f32)
    return acc.astype(compute_dtype)                           # downcast only for next matmul


def mlp_resident_kernel(x_ref, w_ref, b_ref, wout_ref, bout_ref, o_ref, *,
                        n_layer, unroll_layers):
    # x_ref:    [TM, Hp]            tile of input rows (compute dtype, e.g. bf16)
    # w_ref:    [n_layer, Hp, Hp]   stacked hidden weights (x @ w form), VMEM-resident
    # b_ref:    [n_layer, Hp]       f32 biases
    # wout_ref: [Hp, Op]            output weight (lane-padded)
    # bout_ref: [1, Op]             f32 output bias
    # o_ref:    [TM, Op]            output tile (lane-dense: Op % 128 == 0)
    x = x_ref[...]
    if unroll_layers:
        for i in range(n_layer):
            x = _layer_step(x, w_ref[i], b_ref[pl.ds(i, 1), :], x_ref.dtype)
    else:
        def body(i, x):
            return _layer_step(x, w_ref[i], b_ref[pl.ds(i, 1), :], x_ref.dtype)
        x = lax.fori_loop(0, n_layer, body, x)
    # Dropout: identity in eval/inference mode.
    out = jnp.dot(x, wout_ref[...], preferred_element_type=jnp.float32)
    out = out + bout_ref[...]
    o_ref[...] = out.astype(o_ref.dtype)


def mlp_streaming_kernel(x_ref, w_hbm, b_ref, wout_ref, bout_ref, o_ref,
                         wbuf, sem, *, n_layer):
    # Same math as the resident kernel, but the [n_layer, Hp, Hp] weight stack lives
    # in HBM (pl.ANY) and is streamed one layer at a time through a 2-slot VMEM
    # double buffer: prefetch W[i+1] while the MXU runs layer i.
    pltpu.make_async_copy(w_hbm.at[0], wbuf.at[0], sem.at[0]).start()
    x = x_ref[...]
    for i in range(n_layer):
        slot = i & 1
        pltpu.make_async_copy(w_hbm.at[i], wbuf.at[slot], sem.at[slot]).wait()
        if i + 1 < n_layer:
            nxt = (i + 1) & 1
            pltpu.make_async_copy(w_hbm.at[i + 1], wbuf.at[nxt], sem.at[nxt]).start()
        x = _layer_step(x, wbuf[slot], b_ref[pl.ds(i, 1), :], x_ref.dtype)
    # Dropout: identity in eval/inference mode.
    out = jnp.dot(x, wout_ref[...], preferred_element_type=jnp.float32)
    out = out + bout_ref[...]
    o_ref[...] = out.astype(o_ref.dtype)


def _const_spec(shape, single_buffer):
    """BlockSpec for a grid-invariant operand (constant index map)."""
    ndim = len(shape)
    index_map = lambda i, _n=ndim: (0,) * _n
    if single_buffer:
        # Second pipeline buffer is pure waste for a constant index_map.
        return pl.BlockSpec(shape, index_map, pipeline_mode=pl.Buffered(1))
    return pl.BlockSpec(shape, index_map)


def mlp_forward(x, ws, bs, w_out, b_out, *, tile_m=None,
                compute_dtype=jnp.bfloat16, out_dtype=jnp.float32,
                weight_streaming=None, single_buffer_weights=True):
    """x: [M, H]. ws: [n_layer, H, H] (x @ ws[i] form). bs: [n_layer, H].
    w_out: [H, O]. b_out: [O]. Returns [M, O] in out_dtype.

    Matmul operands run in `compute_dtype` (bf16) on the MXU with f32 accumulation;
    bias adds and ReLU are f32. Use reference_mlp_f32 for full-f32 parity runs.
    """
    M, H = x.shape
    n_layer = int(ws.shape[0])
    O = w_out.shape[1]

    cdt = jnp.dtype(compute_dtype)
    odt = jnp.dtype(out_dtype)

    x_c = x.astype(compute_dtype)
    ws_c = ws.astype(compute_dtype)
    wout_c = w_out.astype(compute_dtype)
    bs_f = bs.astype(jnp.float32)
    bout_f = b_out.astype(jnp.float32)

    # Lane-dense hidden and output dims: pad to multiples of 128. Zero-padded H
    # columns stay exactly zero through every bias+ReLU, so results are unchanged.
    H_pad = _round_up(H, 128)
    O_pad = _round_up(O, 128)
    if H_pad != H:
        x_c = jnp.pad(x_c, ((0, 0), (0, H_pad - H)))
        ws_c = jnp.pad(ws_c, ((0, 0), (0, H_pad - H), (0, H_pad - H)))
        bs_f = jnp.pad(bs_f, ((0, 0), (0, H_pad - H)))
        wout_c = jnp.pad(wout_c, ((0, H_pad - H), (0, 0)))
    if O_pad != O:
        wout_c = jnp.pad(wout_c, ((0, 0), (0, O_pad - O)))
        bout_f = jnp.pad(bout_f, (0, O_pad - O))
    bout_f = bout_f.reshape(1, O_pad)

    # Row tile: big for MXU occupancy, clamped for tiny inputs. No jnp.pad over M —
    # the grid uses cdiv and Pallas masks the ragged last tile (OOB rows' garbage
    # reads never feed any cross-row reduction, and their output rows are dropped).
    if tile_m is None:
        tile_m = _default_tile_m()
    tm = max(8, min(int(tile_m), _round_up(M, 8)))
    # v7x megacore: make sure the grid has >= 2 steps when M allows so both TCs work.
    if M > 8 and pl.cdiv(M, tm) < 2:
        tm = max(8, _round_up(pl.cdiv(M, 2), 8))
    grid_m = pl.cdiv(M, tm)

    # VMEM budgeting: decide resident weights vs. per-layer streaming.
    hidden_w_bytes = n_layer * H_pad * H_pad * cdt.itemsize
    out_w_bytes = H_pad * O_pad * cdt.itemsize
    bias_bytes = (n_layer * H_pad + O_pad) * 4
    buf_mult = 1 if single_buffer_weights else 2
    tile_bytes = 2 * tm * H_pad * cdt.itemsize + 2 * tm * O_pad * odt.itemsize
    budget = (_tpu_vmem_capacity() * 3) // 4

    if weight_streaming is None:
        resident_need = buf_mult * (hidden_w_bytes + out_w_bytes + bias_bytes) + tile_bytes
        weight_streaming = resident_need > budget

    if weight_streaming:
        need = (2 * H_pad * H_pad * cdt.itemsize              # 2-slot streamed layer weights
                + buf_mult * (out_w_bytes + bias_bytes) + tile_bytes)
    else:
        need = buf_mult * (hidden_w_bytes + out_w_bytes + bias_bytes) + tile_bytes
    vmem_limit = int(min(budget, max(int(need * 1.25) + (4 << 20), 32 << 20)))

    flops = 2 * M * H_pad * H_pad * n_layer + 2 * M * H_pad * O_pad
    bytes_accessed = (x_c.size * cdt.itemsize + ws_c.size * cdt.itemsize
                      + wout_c.size * cdt.itemsize + bs_f.size * 4 + bout_f.size * 4
                      + M * O_pad * odt.itemsize)

    def _build(single_buffer):
        x_spec = pl.BlockSpec((tm, H_pad), lambda i: (i, 0))
        b_spec = _const_spec((n_layer, H_pad), single_buffer)
        wout_spec = _const_spec((H_pad, O_pad), single_buffer)
        bout_spec = _const_spec((1, O_pad), single_buffer)
        out_spec = pl.BlockSpec((tm, O_pad), lambda i: (i, 0))
        if weight_streaming:
            kernel = functools.partial(mlp_streaming_kernel, n_layer=n_layer)
            w_spec = pl.BlockSpec(memory_space=pl.ANY)       # raw HBM ref, manual DMA
            scratch = [pltpu.VMEM((2, H_pad, H_pad), compute_dtype),
                       pltpu.SemaphoreType.DMA((2,))]
        else:
            kernel = functools.partial(mlp_resident_kernel, n_layer=n_layer,
                                       unroll_layers=(n_layer <= 4))
            w_spec = _const_spec((n_layer, H_pad, H_pad), single_buffer)
            scratch = []
        return pl.pallas_call(
            kernel,
            out_shape=jax.ShapeDtypeStruct((M, O_pad), out_dtype),
            grid_spec=pltpu.PrefetchScalarGridSpec(
                num_scalar_prefetch=0,
                grid=(grid_m,),
                in_specs=[x_spec, w_spec, b_spec, wout_spec, bout_spec],
                out_specs=out_spec,
                scratch_shapes=scratch),
            compiler_params=pltpu.CompilerParams(
                dimension_semantics=("parallel",),
                vmem_limit_bytes=vmem_limit),
            cost_estimate=pl.CostEstimate(flops=flops, transcendentals=0,
                                          bytes_accessed=bytes_accessed),
        )

    args = (x_c, ws_c, bs_f, wout_c, bout_f)
    if single_buffer_weights:
        try:
            out = _build(True)(*args)
        except Exception:
            # Fallback if this JAX build rejects pipeline_mode=pl.Buffered(1).
            out = _build(False)(*args)
    else:
        out = _build(False)(*args)

    return out[:, :O]


def init_params(key, n_layer, hidden_dim, output_dim):
    """Deterministic PyTorch-style init: U(-1/sqrt(fan_in), 1/sqrt(fan_in))."""
    keys = jax.random.split(key, 2 * n_layer + 2)
    bound_h = 1.0 / jnp.sqrt(hidden_dim)
    ws, bs = [], []
    for i in range(n_layer):
        # PyTorch stores W as [out, in]; we store the transpose [in, out]
        # so the kernel computes x @ W^T directly as x @ ws[i].
        w = jax.random.uniform(keys[2 * i], (hidden_dim, hidden_dim),
                               jnp.float32, -bound_h, bound_h)
        b = jax.random.uniform(keys[2 * i + 1], (hidden_dim,),
                               jnp.float32, -bound_h, bound_h)
        ws.append(w)
        bs.append(b)
    ws = jnp.stack(ws)  # [n_layer, H, H]
    bs = jnp.stack(bs)  # [n_layer, H]
    w_out = jax.random.uniform(keys[-2], (hidden_dim, output_dim),
                               jnp.float32, -bound_h, bound_h)
    b_out = jax.random.uniform(keys[-1], (output_dim,),
                               jnp.float32, -bound_h, bound_h)
    return ws, bs, w_out, b_out


def reference_mlp_mixed(x, ws, bs, w_out, b_out, compute_dtype=jnp.bfloat16):
    """Pure-JAX reference mirroring the kernel's bf16-matmul / f32-accumulate recipe."""
    ws = ws.astype(compute_dtype)
    w_out = w_out.astype(compute_dtype)
    h = x.astype(compute_dtype)
    for i in range(ws.shape[0]):
        a = jnp.dot(h, ws[i], preferred_element_type=jnp.float32) + bs[i][None, :]
        a = jnp.maximum(a, 0.0)
        h = a.astype(compute_dtype)
    return jnp.dot(h, w_out, preferred_element_type=jnp.float32) + b_out[None, :]


def reference_mlp_f32(x, ws, bs, w_out, b_out):
    """Full-f32 reference (matches the PyTorch module's default precision)."""
    for i in range(ws.shape[0]):
        x = jnp.maximum(x @ ws[i] + bs[i], 0.0)
    return x @ w_out + b_out


if __name__ == "__main__":
    # Small shapes consistent with the module's forward:
    # x: [batch, seq, hidden] -> flattened rows [batch*seq, hidden]
    batch, seq, hidden, output_dim, n_layer = 2, 8, 32, 16, 2
    key = jax.random.PRNGKey(0)
    k_x, k_p, k_p2 = jax.random.split(key, 3)

    x = jax.random.normal(k_x, (batch, seq, hidden), jnp.float32)
    ws, bs, w_out, b_out = init_params(k_p, n_layer, hidden, output_dim)
    x_flat = x.reshape(batch * seq, hidden)

    # 1) Default path: VMEM-resident, single-buffered weights.
    out_flat = mlp_forward(x_flat, ws, bs, w_out, b_out)
    jax.block_until_ready(out_flat)
    out = out_flat.reshape(batch, seq, output_dim)

    ref_mixed = reference_mlp_mixed(x_flat, ws, bs, w_out, b_out).reshape(
        batch, seq, output_dim)
    assert jnp.allclose(out, ref_mixed, atol=2e-3, rtol=2e-3), (
        float(jnp.max(jnp.abs(out - ref_mixed))))
    ref_f32 = reference_mlp_f32(x_flat, ws, bs, w_out, b_out).reshape(
        batch, seq, output_dim)
    assert jnp.allclose(out, ref_f32, atol=1e-1, rtol=1e-1), (
        float(jnp.max(jnp.abs(out - ref_f32))))

    # 2) Forced per-layer weight-streaming path (what large-H configs use on v7x).
    out_stream = mlp_forward(x_flat, ws, bs, w_out, b_out, weight_streaming=True)
    jax.block_until_ready(out_stream)
    assert jnp.allclose(out_stream.reshape(batch, seq, output_dim), ref_mixed,
                        atol=2e-3, rtol=2e-3), (
        float(jnp.max(jnp.abs(out_stream.reshape(batch, seq, output_dim) - ref_mixed))))

    # 3) Deep MLP exercising the lax.fori_loop layer loop (n_layer > 4).
    n_deep = 6
    ws6, bs6, w_out6, b_out6 = init_params(k_p2, n_deep, hidden, output_dim)
    out_deep = mlp_forward(x_flat, ws6, bs6, w_out6, b_out6)
    jax.block_until_ready(out_deep)
    ref_deep = reference_mlp_mixed(x_flat, ws6, bs6, w_out6, b_out6)
    assert jnp.allclose(out_deep, ref_deep, atol=1e-2, rtol=1e-2), (
        float(jnp.max(jnp.abs(out_deep - ref_deep))))

    print("KERNEL_OK")
</pallas_src>

<mosaic_0001>
module attributes {stable_mosaic.version = 11 : i64} {
  func.func @mlp_resident_kernel(%arg0: i32, %arg1: memref<8x128xbf16, #tpu.memory_space<vmem>>, %arg2: memref<2x128x128xbf16, #tpu.memory_space<vmem>>, %arg3: memref<2x128xf32, #tpu.memory_space<vmem>>, %arg4: memref<128x128xbf16, #tpu.memory_space<vmem>>, %arg5: memref<1x128xf32, #tpu.memory_space<vmem>>, %arg6: memref<8x128xf32, #tpu.memory_space<vmem>>) attributes {dimension_semantics = [#tpu.dimension_semantics<parallel>], iteration_bounds = array<i64: 2>, scalar_prefetch = 0 : i64, scratch_operands = 0 : i64, tpu.core_type = #tpu.core_type<tc>, window_params = [{transform_indices = @transform_0, window_bounds = array<i64: 8, 128>}, {pipeline_mode = #tpu.pipeline_mode<synchronous>, transform_indices = @transform_1, window_bounds = array<i64: 2, 128, 128>}, {pipeline_mode = #tpu.pipeline_mode<synchronous>, transform_indices = @transform_2, window_bounds = array<i64: 2, 128>}, {pipeline_mode = #tpu.pipeline_mode<synchronous>, transform_indices = @transform_3, window_bounds = array<i64: 128, 128>}, {pipeline_mode = #tpu.pipeline_mode<synchronous>, transform_indices = @transform_4, window_bounds = array<i64: 1, 128>}, {transform_indices = @transform_5, window_bounds = array<i64: 8, 128>}]} {
    %c0 = arith.constant 0 : index
    %c0_0 = arith.constant 0 : index
    %0 = vector.load %arg1[%c0, %c0_0] : memref<8x128xbf16, #tpu.memory_space<vmem>>, vector<8x128xbf16>
    %c0_1 = arith.constant 0 : index
    %c0_2 = arith.constant 0 : index
    %c0_3 = arith.constant 0 : index
    %1 = vector.load %arg2[%c0_1, %c0_2, %c0_3] : memref<2x128x128xbf16, #tpu.memory_space<vmem>>, vector<1x128x128xbf16>
    %2 = vector.shape_cast %1 : vector<1x128x128xbf16> to vector<128x128xbf16>
    %c0_4 = arith.constant 0 : index
    %c0_5 = arith.constant 0 : index
    %3 = vector.load %arg3[%c0_4, %c0_5] : memref<2x128xf32, #tpu.memory_space<vmem>>, vector<1x128xf32>
    %cst = arith.constant dense<0.000000e+00> : vector<8x128xf32>
    %4 = tpu.matmul %0, %2, %cst {dimension_numbers = #tpu.dot_dimension_numbers<[1], [0], [0], [1], [0, 0, 1, 1], [], []>} : vector<8x128xbf16>, vector<128x128xbf16>, vector<8x128xf32> -> vector<8x128xf32>
    %5 = vector.broadcast %3 : vector<1x128xf32> to vector<8x128xf32>
    %6 = arith.addf %4, %5 : vector<8x128xf32>
    %cst_6 = arith.constant 0.000000e+00 : f32
    %7 = vector.broadcast %cst_6 : f32 to vector<8x128xf32>
    %8 = arith.maximumf %6, %7 : vector<8x128xf32>
    %9 = arith.truncf %8 : vector<8x128xf32> to vector<8x128xbf16>
    %c1 = arith.constant 1 : index
    %c0_7 = arith.constant 0 : index
    %c0_8 = arith.constant 0 : index
    %10 = vector.load %arg2[%c1, %c0_7, %c0_8] : memref<2x128x128xbf16, #tpu.memory_space<vmem>>, vector<1x128x128xbf16>
    %11 = vector.shape_cast %10 : vector<1x128x128xbf16> to vector<128x128xbf16>
    %c1_9 = arith.constant 1 : index
    %c0_10 = arith.constant 0 : index
    %12 = vector.load %arg3[%c1_9, %c0_10] : memref<2x128xf32, #tpu.memory_space<vmem>>, vector<1x128xf32>
    %cst_11 = arith.constant dense<0.000000e+00> : vector<8x128xf32>
    %13 = tpu.matmul %9, %11, %cst_11 {dimension_numbers = #tpu.dot_dimension_numbers<[1], [0], [0], [1], [0, 0, 1, 1], [], []>} : vector<8x128xbf16>, vector<128x128xbf16>, vector<8x128xf32> -> vector<8x128xf32>
    %14 = vector.broadcast %12 : vector<1x128xf32> to vector<8x128xf32>
    %15 = arith.addf %13, %14 : vector<8x128xf32>
    %cst_12 = arith.constant 0.000000e+00 : f32
    %16 = vector.broadcast %cst_12 : f32 to vector<8x128xf32>
    %17 = arith.maximumf %15, %16 : vector<8x128xf32>
    %18 = arith.truncf %17 : vector<8x128xf32> to vector<8x128xbf16>
    %c0_13 = arith.constant 0 : index
    %c0_14 = arith.constant 0 : index
    %19 = vector.load %arg4[%c0_13, %c0_14] : memref<128x128xbf16, #tpu.memory_space<vmem>>, vector<128x128xbf16>
    %cst_15 = arith.constant dense<0.000000e+00> : vector<8x128xf32>
    %20 = tpu.matmul %18, %19, %cst_15 {dimension_numbers = #tpu.dot_dimension_numbers<[1], [0], [0], [1], [0, 0, 1, 1], [], []>} : vector<8x128xbf16>, vector<128x128xbf16>, vector<8x128xf32> -> vector<8x128xf32>
    %c0_16 = arith.constant 0 : index
    %c0_17 = arith.constant 0 : index
    %21 = vector.load %arg5[%c0_16, %c0_17] : memref<1x128xf32, #tpu.memory_space<vmem>>, vector<1x128xf32>
    %22 = vector.broadcast %21 : vector<1x128xf32> to vector<8x128xf32>
    %23 = arith.addf %20, %22 : vector<8x128xf32>
    %c0_18 = arith.constant 0 : index
    %c0_19 = arith.constant 0 : index
    %24 = vector.load %arg6[%c0_18, %c0_19] : memref<8x128xf32, #tpu.memory_space<vmem>>, vector<8x128xf32>
    tpu.vector_store %arg6[%c0_18, %c0_19], %23 {strides = array<i32>} : memref<8x128xf32, #tpu.memory_space<vmem>>, vector<8x128xf32>,
    return
  }
  func.func @transform_0(%arg0: i32) -> (i32, i32) {
    %c0_i32 = arith.constant 0 : i32
    %c0_i32_0 = arith.constant 0 : i32
    return %arg0, %c0_i32 : i32, i32
  }
  func.func @transform_1(%arg0: i32) -> (i32, i32, i32) {
    %c0_i32 = arith.constant 0 : i32
    %c0_i32_0 = arith.constant 0 : i32
    %c0_i32_1 = arith.constant 0 : i32
    %c0_i32_2 = arith.constant 0 : i32
    return %c0_i32, %c0_i32_0, %c0_i32_1 : i32, i32, i32
  }
  func.func @transform_2(%arg0: i32) -> (i32, i32) {
    %c0_i32 = arith.constant 0 : i32
    %c0_i32_0 = arith.constant 0 : i32
    %c0_i32_1 = arith.constant 0 : i32
    return %c0_i32, %c0_i32_0 : i32, i32
  }
  func.func @transform_3(%arg0: i32) -> (i32, i32) {
    %c0_i32 = arith.constant 0 : i32
    %c0_i32_0 = arith.constant 0 : i32
    %c0_i32_1 = arith.constant 0 : i32
    return %c0_i32, %c0_i32_0 : i32, i32
  }
  func.func @transform_4(%arg0: i32) -> (i32, i32) {
    %c0_i32 = arith.constant 0 : i32
    %c0_i32_0 = arith.constant 0 : i32
    %c0_i32_1 = arith.constant 0 : i32
    return %c0_i32, %c0_i32_0 : i32, i32
  }
  func.func @transform_5(%arg0: i32) -> (i32, i32) {
    %c0_i32 = arith.constant 0 : i32
    %c0_i32_0 = arith.constant 0 : i32
    return %arg0, %c0_i32 : i32, i32
  }
}

module attributes {stable_mosaic.version = 11 : i64} {
  func.func @mlp_resident_kernel(%arg0: i32, %arg1: memref<8x128xbf16, #tpu.memory_space<vmem>>, %arg2: memref<2x128x128xbf16, #tpu.memory_space<vmem>>, %arg3: memref<2x128xf32, #tpu.memory_space<vmem>>, %arg4: memref<128x128xbf16, #tpu.memory_space<vmem>>, %arg5: memref<1x128xf32, #tpu.memory_space<vmem>>, %arg6: memref<8x128xf32, #tpu.memory_space<vmem>>) attributes {dimension_semantics = [#tpu.dimension_semantics<parallel>], iteration_bounds = array<i64: 2>, scalar_prefetch = 0 : i64, scratch_operands = 0 : i64, tpu.core_type = #tpu.core_type<tc>, window_params = [{transform_indices = @transform_0, window_bounds = array<i64: 8, 128>}, {pipeline_mode = #tpu.pipeline_mode<synchronous>, transform_indices = @transform_1, window_bounds = array<i64: 2, 128, 128>}, {pipeline_mode = #tpu.pipeline_mode<synchronous>, transform_indices = @transform_2, window_bounds = array<i64: 2, 128>}, {pipeline_mode = #tpu.pipeline_mode<synchronous>, transform_indices = @transform_3, window_bounds = array<i64: 128, 128>}, {pipeline_mode = #tpu.pipeline_mode<synchronous>, transform_indices = @transform_4, window_bounds = array<i64: 1, 128>}, {transform_indices = @transform_5, window_bounds = array<i64: 8, 128>}]} {
    %c0 = arith.constant 0 : index
    %c0_0 = arith.constant 0 : index
    %0 = vector.load %arg1[%c0, %c0_0] : memref<8x128xbf16, #tpu.memory_space<vmem>>, vector<8x128xbf16>
    %c0_1 = arith.constant 0 : index
    %c0_2 = arith.constant 0 : index
    %c0_3 = arith.constant 0 : index
    %1 = vector.load %arg2[%c0_1, %c0_2, %c0_3] : memref<2x128x128xbf16, #tpu.memory_space<vmem>>, vector<1x128x128xbf16>
    %2 = vector.shape_cast %1 : vector<1x128x128xbf16> to vector<128x128xbf16>
    %c0_4 = arith.constant 0 : index
    %c0_5 = arith.constant 0 : index
    %3 = vector.load %arg3[%c0_4, %c0_5] : memref<2x128xf32, #tpu.memory_space<vmem>>, vector<1x128xf32>
    %cst = arith.constant dense<0.000000e+00> : vector<8x128xf32>
    %4 = tpu.matmul %0, %2, %cst {dimension_numbers = #tpu.dot_dimension_numbers<[1], [0], [0], [1], [0, 0, 1, 1], [], []>} : vector<8x128xbf16>, vector<128x128xbf16>, vector<8x128xf32> -> vector<8x128xf32>
    %5 = vector.broadcast %3 : vector<1x128xf32> to vector<8x128xf32>
    %6 = arith.addf %4, %5 : vector<8x128xf32>
    %cst_6 = arith.constant 0.000000e+00 : f32
    %7 = vector.broadcast %cst_6 : f32 to vector<8x128xf32>
    %8 = arith.maximumf %6, %7 : vector<8x128xf32>
    %9 = arith.truncf %8 : vector<8x128xf32> to vector<8x128xbf16>
    %c1 = arith.constant 1 : index
    %c0_7 = arith.constant 0 : index
    %c0_8 = arith.constant 0 : index
    %10 = vector.load %arg2[%c1, %c0_7, %c0_8] : memref<2x128x128xbf16, #tpu.memory_space<vmem>>, vector<1x128x128xbf16>
    %11 = vector.shape_cast %10 : vector<1x128x128xbf16> to vector<128x128xbf16>
    %c1_9 = arith.constant 1 : index
    %c0_10 = arith.constant 0 : index
    %12 = vector.load %arg3[%c1_9, %c0_10] : memref<2x128xf32, #tpu.memory_space<vmem>>, vector<1x128xf32>
    %cst_11 = arith.constant dense<0.000000e+00> : vector<8x128xf32>
    %13 = tpu.matmul %9, %11, %cst_11 {dimension_numbers = #tpu.dot_dimension_numbers<[1], [0], [0], [1], [0, 0, 1, 1], [], []>} : vector<8x128xbf16>, vector<128x128xbf16>, vector<8x128xf32> -> vector<8x128xf32>
    %14 = vector.broadcast %12 : vector<1x128xf32> to vector<8x128xf32>
    %15 = arith.addf %13, %14 : vector<8x128xf32>
    %cst_12 = arith.constant 0.000000e+00 : f32
    %16 = vector.broadcast %cst_12 : f32 to vector<8x128xf32>
    %17 = arith.maximumf %15, %16 : vector<8x128xf32>
    %18 = arith.truncf %17 : vector<8x128xf32> to vector<8x128xbf16>
    %c0_13 = arith.constant 0 : index
    %c0_14 = arith.constant 0 : index
    %19 = vector.load %arg4[%c0_13, %c0_14] : memref<128x128xbf16, #tpu.memory_space<vmem>>, vector<128x128xbf16>
    %cst_15 = arith.constant dense<0.000000e+00> : vector<8x128xf32>
    %20 = tpu.matmul %18, %19, %cst_15 {dimension_numbers = #tpu.dot_dimension_numbers<[1], [0], [0], [1], [0, 0, 1, 1], [], []>} : vector<8x128xbf16>, vector<128x128xbf16>, vector<8x128xf32> -> vector<8x128xf32>
    %c0_16 = arith.constant 0 : index
    %c0_17 = arith.constant 0 : index
    %21 = vector.load %arg5[%c0_16, %c0_17] : memref<1x128xf32, #tpu.memory_space<vmem>>, vector<1x128xf32>
    %22 = vector.broadcast %21 : vector<1x128xf32> to vector<8x128xf32>
    %23 = arith.addf %20, %22 : vector<8x128xf32>
    %c0_18 = arith.constant 0 : index
    %c0_19 = arith.constant 0 : index
    %24 = vector.load %arg6[%c0_18, %c0_19] : memref<8x128xf32, #tpu.memory_space<vmem>>, vector<8x128xf32>
    tpu.vector_store %arg6[%c0_18, %c0_19], %23 {strides = array<i32>} : memref<8x128xf32, #tpu.memory_space<vmem>>, vector<8x128xf32>,
    return
  }
  func.func @transform_0(%arg0: i32) -> (i32, i32) {
    %c0_i32 = arith.constant 0 : i32
    %c0_i32_0 = arith.constant 0 : i32
    return %arg0, %c0_i32 : i32, i32
  }
  func.func @transform_1(%arg0: i32) -> (i32, i32, i32) {
    %c0_i32 = arith.constant 0 : i32
    %c0_i32_0 = arith.constant 0 : i32
    %c0_i32_1 = arith.constant 0 : i32
    %c0_i32_2 = arith.constant 0 : i32
    return %c0_i32, %c0_i32_0, %c0_i32_1 : i32, i32, i32
  }
  func.func @transform_2(%arg0: i32) -> (i32, i32) {
    %c0_i32 = arith.constant 0 : i32
    %c0_i32_0 = arith.constant 0 : i32
    %c0_i32_1 = arith.constant 0 : i32
    return %c0_i32, %c0_i32_0 : i32, i32
  }
  func.func @transform_3(%arg0: i32) -> (i32, i32) {
    %c0_i32 = arith.constant 0 : i32
    %c0_i32_0 = arith.constant 0 : i32
    %c0_i32_1 = arith.constant 0 : i32
    return %c0_i32, %c0_i32_0 : i32, i32
  }
  func.func @transform_4(%arg0: i32) -> (i32, i32) {
    %c0_i32 = arith.constant 0 : i32
    %c0_i32_0 = arith.constant 0 : i32
    %c0_i32_1 = arith.constant 0 : i32
    return %c0_i32, %c0_i32_0 : i32, i32
  }
  func.func @transform_5(%arg0: i32) -> (i32, i32) {
    %c0_i32 = arith.constant 0 : i32
    %c0_i32_0 = arith.constant 0 : i32
    return %arg0, %c0_i32 : i32, i32
  }
}

</mosaic_0001>

<llo_original>
// kernel: tpu_custom_call.1
$region0: #{tpu_custom_call.1}
  #allocation0 [shape = 'u32[]', space=smem, size = 0x4, offset = 0x4, fixed_abs, tag = 'smem constant byte address 0x4 - core index']
  #allocation1 [shape = 'u32[144,128]{1,0:T(1,128)}', space=vmem, size = 0x12000, scoped, tag = 'internal scratch']
  %s0 = inlined_call_operand.hbm [shape: bf16[16,128], index: 0, kind: input, shape index: {}]
  %s1 = inlined_call_operand.hbm [shape: bf16[2,128,128], index: 1, kind: input, shape index: {}]
  %s2 = inlined_call_operand.vmem [shape: f32[2,128], index: 2, kind: input, shape index: {}]
  %s3 = inlined_call_operand.hbm [shape: bf16[128,128], index: 3, kind: input, shape index: {}]
  %s4 = inlined_call_operand.vmem [shape: f32[1,128], index: 4, kind: input, shape index: {}]
  %s5 = inlined_call_operand.hbm [shape: f32[16,128], index: 5, kind: output, shape index: {}]
  %s6 = sld [smem:[#allocation0]]
  $region65: #{tpu_custom_call.1} parent=0
    _
  %s8 = ssub.s32 1, %s6
  %s9 = scalar_select 0, %s8, %s6
  $region1: #{tpu_custom_call.1} parent=0
    #allocation2 [shape = 'u8[4096]{0}', space=vmem, size = 0x1000, scoped, tag = 'input window, operand 0']
    #allocation3 [shape = 's32[2]{0}', space=sflag, size = 0x8, scoped, tag = 'scoped memory for tpu_custom_call.1']
    #allocation4 [shape = 's32[2]{0}', space=sflag, size = 0x8, scoped, tag = 'scoped memory for tpu_custom_call.1']
    #allocation5 [shape = 'u8[65536]{0}', space=vmem, size = 0x10000, scoped, tag = 'input window, operand 1, single buffered']
    #allocation6 [shape = 's32[1]{0}', space=sflag, size = 0x4, scoped, tag = 'scoped memory for tpu_custom_call.1']
    #allocation7 [shape = 'u8[32768]{0}', space=vmem, size = 0x8000, scoped, tag = 'input window, operand 3, single buffered']
    #allocation8 [shape = 'u8[8192]{0}', space=vmem, size = 0x2000, scoped, tag = 'output window, operand 0']
    %10 = vsyncpa [#allocation3], 0
    %s11 = scalar_lea.sflag [#allocation3], 1
    %12 = vsyncpa %s11, 0
    %13 = vsyncpa [#allocation6], 0
    %14 = vsyncpa [#allocation4], 0
    %s15 = scalar_lea.sflag [#allocation4], 1
    %16 = vsyncpa %s15, 0
    loop: start=0, step=1, limit=4
    $region2: #{tpu_custom_call.1} parent=1 // loop_pre_header
      _
    $region3: #{tpu_custom_call.1} parent=1 // loop_header
      %s18 = sphi 0, %s22
      %p19 = scmp.ge.s32.totalorder %s18, 4
      %s28 = sphi 0, %s30
      %s31 = sphi 0, %s28
      %s32 = sphi 0, %s31
      %s48 = sphi 0, %s32
      %s52 = sphi 0, %s52
      %s54 = sphi 0, %s52
      %s55 = sphi 0, %s54
      %s69 = sphi 0, %s55
      %s73 = sphi 0, %s73
      %s75 = sphi 0, %s73
      %s76 = sphi 0, %s75
      %s90 = sphi 0, %s76
      %s94 = sphi 0, %s94
      %s96 = sphi 0, %s94
      %s97 = sphi 0, %s96
      %s111 = sphi 0, %s97
      %s115 = sphi 0, %s115
      %s117 = sphi 0, %s115
      %s118 = sphi 0, %s117
      %s132 = sphi 0, %s118
      %s138 = sphi 0, %s140
      %s141 = sphi 0, %s138
      %s142 = sphi 0, %s141
      %s158 = sphi 0, %s142
    $region4: #{tpu_custom_call.1} parent=1 // loop_header_branch
      %21 = sbr.rel (%p19) target = $region8
    $region5: #{tpu_custom_call.1} parent=1 // loop_body
      %s23 = ssub.s32 %s18, 1
      %s24 = ssub.s32 %s18, 2
      %s25 = sadd.s32 %s18, 1
      %s26 = ssub.s32 %s18, %s25
      %p27 = scmp.eq.s32.totalorder %s26, 0
      %s29 = sadd.s32 %s28, 1
      %s30 = scalar_select %p27, %s28, %s29
      %p33 = pneg %p27
      %p34 = scmp.eq.s32.totalorder %s18, 1
      %p35 = por %p33, %p34
      %p36 = scmp.ne.s32.totalorder %s28, %s31
      %p37 = scmp.eq.s32.totalorder %s18, 0
      %p38 = por %p36, %p37
      %p39 = scmp.ne.s32.totalorder %s28, %s31
      %p40 = scmp.eq.s32.totalorder %s23, 1
      %p41 = por %p39, %p40
      %p42 = scmp.ne.s32.totalorder %s31, %s32
      %p43 = scmp.eq.s32.totalorder %s23, 0
      %p44 = por %p42, %p43
      %p45 = scmp.ne.s32.totalorder %s31, %s32
      %p46 = scmp.eq.s32.totalorder %s24, 1
      %p47 = por %p45, %p46
      %p49 = scmp.ne.s32.totalorder %s32, %s48
      %p50 = scmp.eq.s32.totalorder %s24, 0
      %p51 = por %p49, %p50
      %s53 = sadd.s32 %s52, 1
      %p56 = scmp.eq.s32.totalorder %s18, 1
      %p57 = scmp.ne.s32.totalorder %s52, %s54
      %p58 = scmp.eq.s32.totalorder %s18, 0
      %p59 = por %p57, %p58
      %p60 = scmp.ne.s32.totalorder %s52, %s54
      %p61 = scmp.eq.s32.totalorder %s23, 1
      %p62 = por %p60, %p61
      %p63 = scmp.ne.s32.totalorder %s54, %s55
      %p64 = scmp.eq.s32.totalorder %s23, 0
      %p65 = por %p63, %p64
      %p66 = scmp.ne.s32.totalorder %s54, %s55
      %p67 = scmp.eq.s32.totalorder %s24, 1
      %p68 = por %p66, %p67
      %p70 = scmp.ne.s32.totalorder %s55, %s69
      %p71 = scmp.eq.s32.totalorder %s24, 0
      %p72 = por %p70, %p71
      %s74 = sadd.s32 %s73, 1
      %p77 = scmp.eq.s32.totalorder %s18, 1
      %p78 = scmp.ne.s32.totalorder %s73, %s75
      %p79 = scmp.eq.s32.totalorder %s18, 0
      %p80 = por %p78, %p79
      %p81 = scmp.ne.s32.totalorder %s73, %s75
      %p82 = scmp.eq.s32.totalorder %s23, 1
      %p83 = por %p81, %p82
      %p84 = scmp.ne.s32.totalorder %s75, %s76
      %p85 = scmp.eq.s32.totalorder %s23, 0
      %p86 = por %p84, %p85
      %p87 = scmp.ne.s32.totalorder %s75, %s76
      %p88 = scmp.eq.s32.totalorder %s24, 1
      %p89 = por %p87, %p88
      %p91 = scmp.ne.s32.totalorder %s76, %s90
      %p92 = scmp.eq.s32.totalorder %s24, 0
      %p93 = por %p91, %p92
      %s95 = sadd.s32 %s94, 1
      %p98 = scmp.eq.s32.totalorder %s18, 1
      %p99 = scmp.ne.s32.totalorder %s94, %s96
      %p100 = scmp.eq.s32.totalorder %s18, 0
      %p101 = por %p99, %p100
      %p102 = scmp.ne.s32.totalorder %s94, %s96
      %p103 = scmp.eq.s32.totalorder %s23, 1
      %p104 = por %p102, %p103
      %p105 = scmp.ne.s32.totalorder %s96, %s97
      %p106 = scmp.eq.s32.totalorder %s23, 0
      %p107 = por %p105, %p106
      %p108 = scmp.ne.s32.totalorder %s96, %s97
      %p109 = scmp.eq.s32.totalorder %s24, 1
      %p110 = por %p108, %p109
      %p112 = scmp.ne.s32.totalorder %s97, %s111
      %p113 = scmp.eq.s32.totalorder %s24, 0
      %p114 = por %p112, %p113
      %s116 = sadd.s32 %s115, 1
      %p119 = scmp.eq.s32.totalorder %s18, 1
      %p120 = scmp.ne.s32.totalorder %s115, %s117
      %p121 = scmp.eq.s32.totalorder %s18, 0
      %p122 = por %p120, %p121
      %p123 = scmp.ne.s32.totalorder %s115, %s117
      %p124 = scmp.eq.s32.totalorder %s23, 1
      %p125 = por %p123, %p124
      %p126 = scmp.ne.s32.totalorder %s117, %s118
      %p127 = scmp.eq.s32.totalorder %s23, 0
      %p128 = por %p126, %p127
      %p129 = scmp.ne.s32.totalorder %s117, %s118
      %p130 = scmp.eq.s32.totalorder %s24, 1
      %p131 = por %p129, %p130
      %p133 = scmp.ne.s32.totalorder %s118, %s132
      %p134 = scmp.eq.s32.totalorder %s24, 0
      %p135 = por %p133, %p134
      %s136 = ssub.s32 %s18, %s25
      %p137 = scmp.eq.s32.totalorder %s136, 0
      %s139 = sadd.s32 %s138, 1
      %s140 = scalar_select %p137, %s138, %s139
      %p143 = pneg %p137
      %p144 = scmp.eq.s32.totalorder %s18, 1
      %p145 = por %p143, %p144
      %p146 = scmp.ne.s32.totalorder %s138, %s141
      %p147 = scmp.eq.s32.totalorder %s18, 0
      %p148 = por %p146, %p147
      %p149 = scmp.ne.s32.totalorder %s138, %s141
      %p150 = scmp.eq.s32.totalorder %s23, 1
      %p151 = por %p149, %p150
      %p152 = scmp.ne.s32.totalorder %s141, %s142
      %p153 = scmp.eq.s32.totalorder %s23, 0
      %p154 = por %p152, %p153
      %p155 = scmp.ne.s32.totalorder %s141, %s142
      %p156 = scmp.eq.s32.totalorder %s24, 1
      %p157 = por %p155, %p156
      %p159 = scmp.ne.s32.totalorder %s142, %s158
      %p160 = scmp.eq.s32.totalorder %s24, 0
      %p161 = por %p159, %p160
      %p162 = scmp.le.s32.totalorder 1, %s18
      %p163 = scmp.lt.s32.totalorder %s18, 3
      %p164 = pnand %p162, %p163
      %p165 = pneg %p164
      // Predicated region
      $region9: #{tpu_custom_call.1} parent=5 // pred_check
        _
      $region10: #{tpu_custom_call.1} parent=5 // pred_check_branch
        %167 = sbr.rel (%p164) target = $region12
      $region11: #{tpu_custom_call.1} parent=5 // pred_region
        %s168 = ssub.s32 %s18, 1
        // Predicated region
        $region13: #{tpu_custom_call.1} parent=11 // pred_check
          %p169 = pneg %p65
        $region14: #{tpu_custom_call.1} parent=11 // pred_check_branch
          %171 = sbr.rel (%p169) target = $region16
        $region15: #{tpu_custom_call.1} parent=11 // pred_region
          %s173 = ssub.s32 2048, 2048
          %174 = vsyncadd [#allocation6], %s173
          %s175 = sshll.u32 [#allocation5], 4
          %s176 = int_to_ptr.vmem [resolvable:$true] %s175
          %181 = dma.hbm_to_vmem [thread:$0]  %s1, 2048, %s176, [#allocation6], 64, 64, 4
        $region16: #{tpu_custom_call.1} parent=11 // pred_fallthru
          _
        // Predicated region
        $region17: #{tpu_custom_call.1} parent=11 // pred_check
          %p182 = pneg %p86
        $region18: #{tpu_custom_call.1} parent=11 // pred_check_branch
          %184 = sbr.rel (%p182) target = $region20
        $region19: #{tpu_custom_call.1} parent=11 // pred_region
          _
        $region20: #{tpu_custom_call.1} parent=11 // pred_fallthru
          _
        // Predicated region
        $region21: #{tpu_custom_call.1} parent=11 // pred_check
          %p185 = pneg %p107
        $region22: #{tpu_custom_call.1} parent=11 // pred_check_branch
          %187 = sbr.rel (%p185) target = $region24
        $region23: #{tpu_custom_call.1} parent=11 // pred_region
          %s189 = ssub.s32 1024, 1024
          %190 = vsyncadd [#allocation6], %s189
          %s191 = sshll.u32 [#allocation7], 4
          %s192 = int_to_ptr.vmem [resolvable:$true] %s191
          %197 = dma.hbm_to_vmem [thread:$0]  %s3, 1024, %s192, [#allocation6], 64, 64, 4
        $region24: #{tpu_custom_call.1} parent=11 // pred_fallthru
          _
        // Predicated region
        $region25: #{tpu_custom_call.1} parent=11 // pred_check
          %p198 = pneg %p128
        $region26: #{tpu_custom_call.1} parent=11 // pred_check_branch
          %200 = sbr.rel (%p198) target = $region28
        $region27: #{tpu_custom_call.1} parent=11 // pred_region
          _
        $region28: #{tpu_custom_call.1} parent=11 // pred_fallthru
          _
      $region12: #{tpu_custom_call.1} parent=5 // pred_fallthru
        _
      %p201 = scmp.lt.s32.totalorder %s18, 2
      // Predicated region
      $region29: #{tpu_custom_call.1} parent=5 // pred_check
        %p202 = pneg %p201
      $region30: #{tpu_custom_call.1} parent=5 // pred_check_branch
        %204 = sbr.rel (%p202) target = $region32
      $region31: #{tpu_custom_call.1} parent=5 // pred_region
        // Predicated region
        $region33: #{tpu_custom_call.1} parent=31 // pred_check
          %p205 = pneg %p38
        $region34: #{tpu_custom_call.1} parent=31 // pred_check_branch
          %207 = sbr.rel (%p205) target = $region36
        $region35: #{tpu_custom_call.1} parent=31 // pred_region
          %s208 = sand.u32 %s28, 1
          %s209 = scalar_lea.sflag [#allocation3], %s208
          %s210 = sand.u32 %s28, 1
          %s211 = smul.addr %s210, 4
          %s212 = scalar_lea.vmem [#allocation2], %s211
          %s214 = ssub.s32 64, 64
          %215 = vsyncadd %s209, %s214
          %s216 = smul.addr %s18, 64
          %s217 = scalar_lea.hbm %s0, %s216
          %s219 = sshll.u32 %s212, 4
          %s220 = int_to_ptr.vmem [resolvable:$true] %s219
          %222 = dma.hbm_to_vmem [thread:$0]  %s217, 64, %s220, %s209
        $region36: #{tpu_custom_call.1} parent=31 // pred_fallthru
          _
      $region32: #{tpu_custom_call.1} parent=5 // pred_fallthru
        _
      %p223 = scmp.le.s32.totalorder 1, %s18
      %p224 = scmp.lt.s32.totalorder %s18, 3
      %p225 = pnand %p223, %p224
      %p226 = pneg %p225
      // Predicated region
      $region37: #{tpu_custom_call.1} parent=5 // pred_check
        _
      $region38: #{tpu_custom_call.1} parent=5 // pred_check_branch
        %228 = sbr.rel (%p225) target = $region40
      $region39: #{tpu_custom_call.1} parent=5 // pred_region
        %s229 = ssub.s32 %s18, 1
        %s230 = sand.u32 %s31, 1
        %s231 = scalar_lea.sflag [#allocation3], %s230
        %s232 = sand.u32 %s31, 1
        %s233 = smul.addr %s232, 4
        %s234 = scalar_lea.vmem [#allocation2], %s233
        // Predicated region
        $region41: #{tpu_custom_call.1} parent=39 // pred_check
          %p235 = pneg %p44
        $region42: #{tpu_custom_call.1} parent=39 // pred_check_branch
          %237 = sbr.rel (%p235) target = $region44
        $region43: #{tpu_custom_call.1} parent=39 // pred_region
          %238 = dma.done %s231, 64
        $region44: #{tpu_custom_call.1} parent=39 // pred_fallthru
          _
        // Predicated region
        $region45: #{tpu_custom_call.1} parent=39 // pred_check
          %p239 = pneg %p65
        $region46: #{tpu_custom_call.1} parent=39 // pred_check_branch
          %241 = sbr.rel (%p239) target = $region48
        $region47: #{tpu_custom_call.1} parent=39 // pred_region
          %242 = dma.done [#allocation6], 2048
        $region48: #{tpu_custom_call.1} parent=39 // pred_fallthru
          _
        // Predicated region
        $region49: #{tpu_custom_call.1} parent=39 // pred_check
          %p243 = pneg %p107
        $region50: #{tpu_custom_call.1} parent=39 // pred_check_branch
          %245 = sbr.rel (%p243) target = $region52
        $region51: #{tpu_custom_call.1} parent=39 // pred_region
          %246 = dma.done [#allocation6], 1024
        $region52: #{tpu_custom_call.1} parent=39 // pred_fallthru
          _
        %s247 = sand.u32 %s31, 1
        %s248 = scalar_lea.sflag [#allocation3], %s247
        %s249 = sand.u32 %s31, 1
        %s250 = smul.addr %s249, 4
        %s251 = scalar_lea.vmem [#allocation2], %s250
        %p252 = pneg %p44
        %p253 = pneg %p41
        %p254 = pneg %p65
        %p255 = pneg %p62
        %p256 = pneg %p86
        %p257 = pneg %p83
        %p258 = pneg %p107
        %p259 = pneg %p104
        %p260 = pneg %p128
        %p261 = pneg %p125
        %p262 = pneg %p154
        %p263 = pneg %p151
        %s264 = sand.u32 %s141, 1
        %s265 = scalar_lea.sflag [#allocation4], %s264
        %s266 = sand.u32 %s141, 1
        %s267 = smul.addr %s266, 8
        %s268 = scalar_lea.vmem [#allocation8], %s267
        %v270 = vld [vmem:[%s234] sm:$0xf]
        %v271 = vld [vmem:[#allocation5] sm:$0xf]
        %v272 = vld [vmem:[#allocation5 + $0x4] sm:$0xf]
        %v273 = vld [vmem:[#allocation5 + $0x8] sm:$0xf]
        %v274 = vld [vmem:[#allocation5 + $0xc] sm:$0xf]
        %v275 = vld [vmem:[#allocation5 + $0x10] sm:$0xf]
        %v276 = vld [vmem:[#allocation5 + $0x14] sm:$0xf]
        %v277 = vld [vmem:[#allocation5 + $0x18] sm:$0xf]
        %v278 = vld [vmem:[#allocation5 + $0x1c] sm:$0xf]
        %v279 = vld [vmem:[#allocation5 + $0x20] sm:$0xf]
        %v280 = vld [vmem:[#allocation5 + $0x24] sm:$0xf]
        %v281 = vld [vmem:[#allocation5 + $0x28] sm:$0xf]
        %v282 = vld [vmem:[#allocation5 + $0x2c] sm:$0xf]
        %v283 = vld [vmem:[#allocation5 + $0x30] sm:$0xf]
        %v284 = vld [vmem:[#allocation5 + $0x34] sm:$0xf]
        %v285 = vld [vmem:[#allocation5 + $0x38] sm:$0xf]
        %v286 = vld [vmem:[#allocation5 + $0x3c] sm:$0xf]
        %v287 = vld [vmem:[%s2] sm:$0x1]
        %v288 = vlaneseq
        %v289 = vshrl.u32 %v288, 7
        %v290 = vsub.s32 0, %v289
        %v291 = vrot.slane %v287, %v290
        %v308 = vunpack.c.l.b16 %v271
        %v309 = vunpack.c.l.b16 %v272
        %v310 = vunpack.c.l.b16 %v273
        %v311 = vunpack.c.l.b16 %v274
        %v312 = vunpack.c.l.b16 %v275
        %v313 = vunpack.c.l.b16 %v276
        %v314 = vunpack.c.l.b16 %v277
        %v315 = vunpack.c.l.b16 %v278
        %v316 = vunpack.c.l.b16 %v279
        %v317 = vunpack.c.l.b16 %v280
        %v318 = vunpack.c.l.b16 %v281
        %v319 = vunpack.c.l.b16 %v282
        %v320 = vunpack.c.l.b16 %v283
        %v321 = vunpack.c.l.b16 %v284
        %v322 = vunpack.c.l.b16 %v285
        %v323 = vunpack.c.l.b16 %v286
        %v324 = vpack.c.b16 %v309, %v308
        %v325 = vpack.c.b16 %v311, %v310
        %v326 = vpack.c.b16 %v313, %v312
        %v327 = vpack.c.b16 %v315, %v314
        %v328 = vpack.c.b16 %v317, %v316
        %v329 = vpack.c.b16 %v319, %v318
        %v330 = vpack.c.b16 %v321, %v320
        %v331 = vpack.c.b16 %v323, %v322
        %340 = vmatprep.subr.bf16.mxu0 0
        %341 = vmatpush1.bf16.msra.mxu0 %v324
        %342 = vmatprep.subr.bf16.mxu0 0
        %343 = vmatpush1.bf16.msra.mxu0 %v325
        %344 = vmatprep.subr.bf16.mxu0 0
        %345 = vmatpush1.bf16.msra.mxu0 %v326
        %346 = vmatprep.subr.bf16.mxu0 0
        %347 = vmatpush1.bf16.msra.mxu0 %v327
        %348 = vmatprep.subr.bf16.mxu0 0
        %349 = vmatpush1.bf16.msra.mxu0 %v328
        %350 = vmatprep.subr.bf16.mxu0 0
        %351 = vmatpush1.bf16.msra.mxu0 %v329
        %352 = vmatprep.subr.bf16.mxu0 0
        %353 = vmatpush1.bf16.msra.mxu0 %v330
        %354 = vmatprep.subr.bf16.mxu0 0
        %355 = vmatpush1.bf16.msra.mxu0 %v331
        %356 = vmatprep.subr.bf16.mxu0 0
        %357 = vmatpush1.bf16.msra.mxu0 0
        %358 = vmatprep.subr.bf16.mxu0 0
        %359 = vmatpush1.bf16.msra.mxu0 0
        %360 = vmatprep.subr.bf16.mxu0 0
        %361 = vmatpush1.bf16.msra.mxu0 0
        %362 = vmatprep.subr.bf16.mxu0 0
        %363 = vmatpush1.bf16.msra.mxu0 0
        %364 = vmatprep.subr.bf16.mxu0 0
        %365 = vmatpush1.bf16.msra.mxu0 0
        %366 = vmatprep.subr.bf16.mxu0 0
        %367 = vmatpush1.bf16.msra.mxu0 0
        %368 = vmatprep.subr.bf16.mxu0 0
        %369 = vmatpush1.bf16.msra.mxu0 0
        %370 = vmatprep.subr.bf16.mxu0 0
        %371 = vmatpush1.bf16.msra.mxu0 0
        %372 = vmatprep.mubr.bf16.mxu0 0
        %373 = vmatmul.mubr.bf16.gmra.mrb[0].mxu0 %v270
        %v374 = vpop.f32.mrb[0].mxu0
        %v375 = vadd.f32 %v291, %v374
        %v376 = vpop.f32.mrb[0].mxu0
        %v377 = vpop.f32.mrb[0].mxu0
        %v378 = vpop.f32.mrb[0].mxu0
        %379 = vdwg.mxu0
        %v380 = vmax.f32 %v375, 0.0
        %v381 = vpack.c.bf16 %v380, %v380
        %s382 = scalar_lea.vmem [#allocation5], 64
        %v383 = vld [vmem:[%s382] sm:$0xf]
        %v384 = vld [vmem:[%s382 + $0x4] sm:$0xf]
        %v385 = vld [vmem:[%s382 + $0x8] sm:$0xf]
        %v386 = vld [vmem:[%s382 + $0xc] sm:$0xf]
        %v387 = vld [vmem:[%s382 + $0x10] sm:$0xf]
        %v388 = vld [vmem:[%s382 + $0x14] sm:$0xf]
        %v389 = vld [vmem:[%s382 + $0x18] sm:$0xf]
        %v390 = vld [vmem:[%s382 + $0x1c] sm:$0xf]
        %v391 = vld [vmem:[%s382 + $0x20] sm:$0xf]
        %v392 = vld [vmem:[%s382 + $0x24] sm:$0xf]
        %v393 = vld [vmem:[%s382 + $0x28] sm:$0xf]
        %v394 = vld [vmem:[%s382 + $0x2c] sm:$0xf]
        %v395 = vld [vmem:[%s382 + $0x30] sm:$0xf]
        %v396 = vld [vmem:[%s382 + $0x34] sm:$0xf]
        %v397 = vld [vmem:[%s382 + $0x38] sm:$0xf]
        %v398 = vld [vmem:[%s382 + $0x3c] sm:$0xf]
        %v399 = vld [vmem:[%s2 + $0x1] sm:$0x1]
        %v400 = vlaneseq
        %v401 = vshrl.u32 %v400, 7
        %v402 = vsub.s32 0, %v401
        %v403 = vrot.slane %v399, %v402
        %v420 = vunpack.c.l.b16 %v383
        %v421 = vunpack.c.l.b16 %v384
        %v422 = vunpack.c.l.b16 %v385
        %v423 = vunpack.c.l.b16 %v386
        %v424 = vunpack.c.l.b16 %v387
        %v425 = vunpack.c.l.b16 %v388
        %v426 = vunpack.c.l.b16 %v389
        %v427 = vunpack.c.l.b16 %v390
        %v428 = vunpack.c.l.b16 %v391
        %v429 = vunpack.c.l.b16 %v392
        %v430 = vunpack.c.l.b16 %v393
        %v431 = vunpack.c.l.b16 %v394
        %v432 = vunpack.c.l.b16 %v395
        %v433 = vunpack.c.l.b16 %v396
        %v434 = vunpack.c.l.b16 %v397
        %v435 = vunpack.c.l.b16 %v398
        %v436 = vpack.c.b16 %v421, %v420
        %v437 = vpack.c.b16 %v423, %v422
        %v438 = vpack.c.b16 %v425, %v424
        %v439 = vpack.c.b16 %v427, %v426
        %v440 = vpack.c.b16 %v429, %v428
        %v441 = vpack.c.b16 %v431, %v430
        %v442 = vpack.c.b16 %v433, %v432
        %v443 = vpack.c.b16 %v435, %v434
        %452 = vmatprep.subr.bf16.mxu0 0
        %453 = vmatpush1.bf16.msra.mxu0 %v436
        %454 = vmatprep.subr.bf16.mxu0 0
        %455 = vmatpush1.bf16.msra.mxu0 %v437
        %456 = vmatprep.subr.bf16.mxu0 0
        %457 = vmatpush1.bf16.msra.mxu0 %v438
        %458 = vmatprep.subr.bf16.mxu0 0
        %459 = vmatpush1.bf16.msra.mxu0 %v439
        %460 = vmatprep.subr.bf16.mxu0 0
        %461 = vmatpush1.bf16.msra.mxu0 %v440
        %462 = vmatprep.subr.bf16.mxu0 0
        %463 = vmatpush1.bf16.msra.mxu0 %v441
        %464 = vmatprep.subr.bf16.mxu0 0
        %465 = vmatpush1.bf16.msra.mxu0 %v442
        %466 = vmatprep.subr.bf16.mxu0 0
        %467 = vmatpush1.bf16.msra.mxu0 %v443
        %468 = vmatprep.subr.bf16.mxu0 0
        %469 = vmatpush1.bf16.msra.mxu0 0
        %470 = vmatprep.subr.bf16.mxu0 0
        %471 = vmatpush1.bf16.msra.mxu0 0
        %472 = vmatprep.subr.bf16.mxu0 0
        %473 = vmatpush1.bf16.msra.mxu0 0
        %474 = vmatprep.subr.bf16.mxu0 0
        %475 = vmatpush1.bf16.msra.mxu0 0
        %476 = vmatprep.subr.bf16.mxu0 0
        %477 = vmatpush1.bf16.msra.mxu0 0
        %478 = vmatprep.subr.bf16.mxu0 0
        %479 = vmatpush1.bf16.msra.mxu0 0
        %480 = vmatprep.subr.bf16.mxu0 0
        %481 = vmatpush1.bf16.msra.mxu0 0
        %482 = vmatprep.subr.bf16.mxu0 0
        %483 = vmatpush1.bf16.msra.mxu0 0
        %484 = vmatprep.mubr.bf16.mxu0 0
        %485 = vmatmul.mubr.bf16.gmra.mrb[0].mxu0 %v381
        %v486 = vpop.f32.mrb[0].mxu0
        %v487 = vadd.f32 %v403, %v486
        %v488 = vpop.f32.mrb[0].mxu0
        %v489 = vpop.f32.mrb[0].mxu0
        %v490 = vpop.f32.mrb[0].mxu0
        %491 = vdwg.mxu0
        %v492 = vmax.f32 %v487, 0.0
        %v493 = vpack.c.bf16 %v492, %v492
        %v494 = vld [vmem:[#allocation7] sm:$0xf]
        %v495 = vld [vmem:[#allocation7 + $0x4] sm:$0xf]
        %v496 = vld [vmem:[#allocation7 + $0x8] sm:$0xf]
        %v497 = vld [vmem:[#allocation7 + $0xc] sm:$0xf]
        %v498 = vld [vmem:[#allocation7 + $0x10] sm:$0xf]
        %v499 = vld [vmem:[#allocation7 + $0x14] sm:$0xf]
        %v500 = vld [vmem:[#allocation7 + $0x18] sm:$0xf]
        %v501 = vld [vmem:[#allocation7 + $0x1c] sm:$0xf]
        %v502 = vld [vmem:[#allocation7 + $0x20] sm:$0xf]
        %v503 = vld [vmem:[#allocation7 + $0x24] sm:$0xf]
        %v504 = vld [vmem:[#allocation7 + $0x28] sm:$0xf]
        %v505 = vld [vmem:[#allocation7 + $0x2c] sm:$0xf]
        %v506 = vld [vmem:[#allocation7 + $0x30] sm:$0xf]
        %v507 = vld [vmem:[#allocation7 + $0x34] sm:$0xf]
        %v508 = vld [vmem:[#allocation7 + $0x38] sm:$0xf]
        %v509 = vld [vmem:[#allocation7 + $0x3c] sm:$0xf]
        %v510 = vld [vmem:[%s4] sm:$0x1]
        %v512 = vlaneseq
        %v513 = vshrl.u32 %v512, 7
        %v514 = vsub.s32 0, %v513
        %v515 = vrot.slane %v510, %v514
        %v533 = vunpack.c.l.b16 %v494
        %v534 = vunpack.c.l.b16 %v495
        %v535 = vunpack.c.l.b16 %v496
        %v536 = vunpack.c.l.b16 %v497
        %v537 = vunpack.c.l.b16 %v498
        %v538 = vunpack.c.l.b16 %v499
        %v539 = vunpack.c.l.b16 %v500
        %v540 = vunpack.c.l.b16 %v501
        %v541 = vunpack.c.l.b16 %v502
        %v542 = vunpack.c.l.b16 %v503
        %v543 = vunpack.c.l.b16 %v504
        %v544 = vunpack.c.l.b16 %v505
        %v545 = vunpack.c.l.b16 %v506
        %v546 = vunpack.c.l.b16 %v507
        %v547 = vunpack.c.l.b16 %v508
        %v548 = vunpack.c.l.b16 %v509
        %v549 = vpack.c.b16 %v534, %v533
        %v550 = vpack.c.b16 %v536, %v535
        %v551 = vpack.c.b16 %v538, %v537
        %v552 = vpack.c.b16 %v540, %v539
        %v553 = vpack.c.b16 %v542, %v541
        %v554 = vpack.c.b16 %v544, %v543
        %v555 = vpack.c.b16 %v546, %v545
        %v556 = vpack.c.b16 %v548, %v547
        %565 = vmatprep.subr.bf16.mxu0 0
        %566 = vmatpush1.bf16.msra.mxu0 %v549
        %567 = vmatprep.subr.bf16.mxu0 0
        %568 = vmatpush1.bf16.msra.mxu0 %v550
        %569 = vmatprep.subr.bf16.mxu0 0
        %570 = vmatpush1.bf16.msra.mxu0 %v551
        %571 = vmatprep.subr.bf16.mxu0 0
        %572 = vmatpush1.bf16.msra.mxu0 %v552
        %573 = vmatprep.subr.bf16.mxu0 0
        %574 = vmatpush1.bf16.msra.mxu0 %v553
        %575 = vmatprep.subr.bf16.mxu0 0
        %576 = vmatpush1.bf16.msra.mxu0 %v554
        %577 = vmatprep.subr.bf16.mxu0 0
        %578 = vmatpush1.bf16.msra.mxu0 %v555
        %579 = vmatprep.subr.bf16.mxu0 0
        %580 = vmatpush1.bf16.msra.mxu0 %v556
        %581 = vmatprep.subr.bf16.mxu0 0
        %582 = vmatpush1.bf16.msra.mxu0 0
        %583 = vmatprep.subr.bf16.mxu0 0
        %584 = vmatpush1.bf16.msra.mxu0 0
        %585 = vmatprep.subr.bf16.mxu0 0
        %586 = vmatpush1.bf16.msra.mxu0 0
        %587 = vmatprep.subr.bf16.mxu0 0
        %588 = vmatpush1.bf16.msra.mxu0 0
        %589 = vmatprep.subr.bf16.mxu0 0
        %590 = vmatpush1.bf16.msra.mxu0 0
        %591 = vmatprep.subr.bf16.mxu0 0
        %592 = vmatpush1.bf16.msra.mxu0 0
        %593 = vmatprep.subr.bf16.mxu0 0
        %594 = vmatpush1.bf16.msra.mxu0 0
        %595 = vmatprep.subr.bf16.mxu0 0
        %596 = vmatpush1.bf16.msra.mxu0 0
        %597 = vmatprep.mubr.bf16.mxu0 0
        %598 = vmatmul.mubr.bf16.gmra.mrb[0].mxu0 %v493
        %v599 = vpop.f32.mrb[0].mxu0
        %v600 = vadd.f32 %v515, %v599
        %v601 = vpop.f32.mrb[0].mxu0
        %v602 = vpop.f32.mrb[0].mxu0
        %v603 = vpop.f32.mrb[0].mxu0
        %604 = vdwg.mxu0
        %605 = vst [vmem:[%s268] sm:$0xff] %v600
        %s606 = sand.u32 %s141, 1
        %s607 = scalar_lea.sflag [#allocation4], %s606
        %s608 = sand.u32 %s141, 1
        %s609 = smul.addr %s608, 8
        %s610 = scalar_lea.vmem [#allocation8], %s609
        // Predicated region
        $region53: #{tpu_custom_call.1} parent=39 // pred_check
          %p611 = pneg %p151
        $region54: #{tpu_custom_call.1} parent=39 // pred_check_branch
          %613 = sbr.rel (%p611) target = $region56
        $region55: #{tpu_custom_call.1} parent=39 // pred_region
          %s615 = ssub.s32 128, 128
          %616 = vsyncadd %s607, %s615
          %s617 = smul.addr %s23, 128
          %s618 = scalar_lea.hbm %s5, %s617
          %s620 = sshll.u32 %s610, 4
          %s621 = int_to_ptr.vmem [resolvable:$true] %s620
          %623 = dma.vmem_to_hbm [thread:$0]  %s621, 128, %s618, %s607
        $region56: #{tpu_custom_call.1} parent=39 // pred_fallthru
          _
      $region40: #{tpu_custom_call.1} parent=5 // pred_fallthru
        _
      %p624 = scmp.le.s32.totalorder 2, %s18
      // Predicated region
      $region57: #{tpu_custom_call.1} parent=5 // pred_check
        %p625 = pneg %p624
      $region58: #{tpu_custom_call.1} parent=5 // pred_check_branch
        %627 = sbr.rel (%p625) target = $region60
      $region59: #{tpu_custom_call.1} parent=5 // pred_region
        %s628 = ssub.s32 %s18, 2
        // Predicated region
        $region61: #{tpu_custom_call.1} parent=59 // pred_check
          %p629 = pneg %p157
        $region62: #{tpu_custom_call.1} parent=59 // pred_check_branch
          %631 = sbr.rel (%p629) target = $region64
        $region63: #{tpu_custom_call.1} parent=59 // pred_region
          %s632 = sand.u32 %s142, 1
          %s633 = scalar_lea.sflag [#allocation4], %s632
          %s634 = sand.u32 %s142, 1
          %s635 = smul.addr %s634, 8
          %s636 = scalar_lea.vmem [#allocation8], %s635
          %637 = dma.done %s633, 128
        $region64: #{tpu_custom_call.1} parent=59 // pred_fallthru
          _
      $region60: #{tpu_custom_call.1} parent=5 // pred_fallthru
        _
    $region6: #{tpu_custom_call.1} parent=1 // loop_footer
      %s22 = sadd.s32 1, %s18
    $region7: #{tpu_custom_call.1} parent=1 // loop_footer_branch
      %17 = sbr.rel target = $region3
    $region8: #{tpu_custom_call.1} parent=1 // loop_exit
      _
    %638 = vsyncpa [#allocation3], 1
    %s639 = scalar_lea.sflag [#allocation3], 1
    %640 = vsyncpa %s639, 1
    %641 = vsyncpa [#allocation6], 1
    %642 = vsyncpa [#allocation4], 1
    %s643 = scalar_lea.sflag [#allocation4], 1
    %644 = vsyncpa %s643, 1

// kernel: tpu_custom_call.1
$region0: #{tpu_custom_call.1}
  #allocation0 [shape = 'u32[]', space=smem, size = 0x4, offset = 0x4, fixed_abs, tag = 'smem constant byte address 0x4 - core index']
  #allocation1 [shape = 'u32[144,128]{1,0:T(1,128)}', space=vmem, size = 0x12000, scoped, tag = 'internal scratch']
  %s0 = inlined_call_operand.hbm [shape: bf16[16,128], index: 0, kind: input, shape index: {}]
  %s1 = inlined_call_operand.hbm [shape: bf16[2,128,128], index: 1, kind: input, shape index: {}]
  %s2 = inlined_call_operand.vmem [shape: f32[2,128], index: 2, kind: input, shape index: {}]
  %s3 = inlined_call_operand.hbm [shape: bf16[128,128], index: 3, kind: input, shape index: {}]
  %s4 = inlined_call_operand.vmem [shape: f32[1,128], index: 4, kind: input, shape index: {}]
  %s5 = inlined_call_operand.hbm [shape: f32[16,128], index: 5, kind: output, shape index: {}]
  %s6 = sld [smem:[#allocation0]]
  $region65: #{tpu_custom_call.1} parent=0
    _
  %s8 = ssub.s32 1, %s6
  %s9 = scalar_select 0, %s8, %s6
  $region1: #{tpu_custom_call.1} parent=0
    #allocation2 [shape = 'u8[4096]{0}', space=vmem, size = 0x1000, scoped, tag = 'input window, operand 0']
    #allocation3 [shape = 's32[2]{0}', space=sflag, size = 0x8, scoped, tag = 'scoped memory for tpu_custom_call.1']
    #allocation4 [shape = 's32[2]{0}', space=sflag, size = 0x8, scoped, tag = 'scoped memory for tpu_custom_call.1']
    #allocation5 [shape = 'u8[65536]{0}', space=vmem, size = 0x10000, scoped, tag = 'input window, operand 1, single buffered']
    #allocation6 [shape = 's32[1]{0}', space=sflag, size = 0x4, scoped, tag = 'scoped memory for tpu_custom_call.1']
    #allocation7 [shape = 'u8[32768]{0}', space=vmem, size = 0x8000, scoped, tag = 'input window, operand 3, single buffered']
    #allocation8 [shape = 'u8[8192]{0}', space=vmem, size = 0x2000, scoped, tag = 'output window, operand 0']
    %10 = vsyncpa [#allocation3], 0
    %s11 = scalar_lea.sflag [#allocation3], 1
    %12 = vsyncpa %s11, 0
    %13 = vsyncpa [#allocation6], 0
    %14 = vsyncpa [#allocation4], 0
    %s15 = scalar_lea.sflag [#allocation4], 1
    %16 = vsyncpa %s15, 0
    loop: start=0, step=1, limit=4
    $region2: #{tpu_custom_call.1} parent=1 // loop_pre_header
      _
    $region3: #{tpu_custom_call.1} parent=1 // loop_header
      %s18 = sphi 0, %s22
      %p19 = scmp.ge.s32.totalorder %s18, 4
      %s28 = sphi 0, %s30
      %s31 = sphi 0, %s28
      %s32 = sphi 0, %s31
      %s48 = sphi 0, %s32
      %s52 = sphi 0, %s52
      %s54 = sphi 0, %s52
      %s55 = sphi 0, %s54
      %s69 = sphi 0, %s55
      %s73 = sphi 0, %s73
      %s75 = sphi 0, %s73
      %s76 = sphi 0, %s75
      %s90 = sphi 0, %s76
      %s94 = sphi 0, %s94
      %s96 = sphi 0, %s94
      %s97 = sphi 0, %s96
      %s111 = sphi 0, %s97
      %s115 = sphi 0, %s115
      %s117 = sphi 0, %s115
      %s118 = sphi 0, %s117
      %s132 = sphi 0, %s118
      %s138 = sphi 0, %s140
      %s141 = sphi 0, %s138
      %s142 = sphi 0, %s141
      %s158 = sphi 0, %s142
    $region4: #{tpu_custom_call.1} parent=1 // loop_header_branch
      %21 = sbr.rel (%p19) target = $region8
    $region5: #{tpu_custom_call.1} parent=1 // loop_body
      %s23 = ssub.s32 %s18, 1
      %s24 = ssub.s32 %s18, 2
      %s25 = sadd.s32 %s18, 1
      %s26 = ssub.s32 %s18, %s25
      %p27 = scmp.eq.s32.totalorder %s26, 0
      %s29 = sadd.s32 %s28, 1
      %s30 = scalar_select %p27, %s28, %s29
      %p33 = pneg %p27
      %p34 = scmp.eq.s32.totalorder %s18, 1
      %p35 = por %p33, %p34
      %p36 = scmp.ne.s32.totalorder %s28, %s31
      %p37 = scmp.eq.s32.totalorder %s18, 0
      %p38 = por %p36, %p37
      %p39 = scmp.ne.s32.totalorder %s28, %s31
      %p40 = scmp.eq.s32.totalorder %s23, 1
      %p41 = por %p39, %p40
      %p42 = scmp.ne.s32.totalorder %s31, %s32
      %p43 = scmp.eq.s32.totalorder %s23, 0
      %p44 = por %p42, %p43
      %p45 = scmp.ne.s32.totalorder %s31, %s32
      %p46 = scmp.eq.s32.totalorder %s24, 1
      %p47 = por %p45, %p46
      %p49 = scmp.ne.s32.totalorder %s32, %s48
      %p50 = scmp.eq.s32.totalorder %s24, 0
      %p51 = por %p49, %p50
      %s53 = sadd.s32 %s52, 1
      %p56 = scmp.eq.s32.totalorder %s18, 1
      %p57 = scmp.ne.s32.totalorder %s52, %s54
      %p58 = scmp.eq.s32.totalorder %s18, 0
      %p59 = por %p57, %p58
      %p60 = scmp.ne.s32.totalorder %s52, %s54
      %p61 = scmp.eq.s32.totalorder %s23, 1
      %p62 = por %p60, %p61
      %p63 = scmp.ne.s32.totalorder %s54, %s55
      %p64 = scmp.eq.s32.totalorder %s23, 0
      %p65 = por %p63, %p64
      %p66 = scmp.ne.s32.totalorder %s54, %s55
      %p67 = scmp.eq.s32.totalorder %s24, 1
      %p68 = por %p66, %p67
      %p70 = scmp.ne.s32.totalorder %s55, %s69
      %p71 = scmp.eq.s32.totalorder %s24, 0
      %p72 = por %p70, %p71
      %s74 = sadd.s32 %s73, 1
      %p77 = scmp.eq.s32.totalorder %s18, 1
      %p78 = scmp.ne.s32.totalorder %s73, %s75
      %p79 = scmp.eq.s32.totalorder %s18, 0
      %p80 = por %p78, %p79
      %p81 = scmp.ne.s32.totalorder %s73, %s75
      %p82 = scmp.eq.s32.totalorder %s23, 1
      %p83 = por %p81, %p82
      %p84 = scmp.ne.s32.totalorder %s75, %s76
      %p85 = scmp.eq.s32.totalorder %s23, 0
      %p86 = por %p84, %p85
      %p87 = scmp.ne.s32.totalorder %s75, %s76
      %p88 = scmp.eq.s32.totalorder %s24, 1
      %p89 = por %p87, %p88
      %p91 = scmp.ne.s32.totalorder %s76, %s90
      %p92 = scmp.eq.s32.totalorder %s24, 0
      %p93 = por %p91, %p92
      %s95 = sadd.s32 %s94, 1
      %p98 = scmp.eq.s32.totalorder %s18, 1
      %p99 = scmp.ne.s32.totalorder %s94, %s96
      %p100 = scmp.eq.s32.totalorder %s18, 0
      %p101 = por %p99, %p100
      %p102 = scmp.ne.s32.totalorder %s94, %s96
      %p103 = scmp.eq.s32.totalorder %s23, 1
      %p104 = por %p102, %p103
      %p105 = scmp.ne.s32.totalorder %s96, %s97
      %p106 = scmp.eq.s32.totalorder %s23, 0
      %p107 = por %p105, %p106
      %p108 = scmp.ne.s32.totalorder %s96, %s97
      %p109 = scmp.eq.s32.totalorder %s24, 1
      %p110 = por %p108, %p109
      %p112 = scmp.ne.s32.totalorder %s97, %s111
      %p113 = scmp.eq.s32.totalorder %s24, 0
      %p114 = por %p112, %p113
      %s116 = sadd.s32 %s115, 1
      %p119 = scmp.eq.s32.totalorder %s18, 1
      %p120 = scmp.ne.s32.totalorder %s115, %s117
      %p121 = scmp.eq.s32.totalorder %s18, 0
      %p122 = por %p120, %p121
      %p123 = scmp.ne.s32.totalorder %s115, %s117
      %p124 = scmp.eq.s32.totalorder %s23, 1
      %p125 = por %p123, %p124
      %p126 = scmp.ne.s32.totalorder %s117, %s118
      %p127 = scmp.eq.s32.totalorder %s23, 0
      %p128 = por %p126, %p127
      %p129 = scmp.ne.s32.totalorder %s117, %s118
      %p130 = scmp.eq.s32.totalorder %s24, 1
      %p131 = por %p129, %p130
      %p133 = scmp.ne.s32.totalorder %s118, %s132
      %p134 = scmp.eq.s32.totalorder %s24, 0
      %p135 = por %p133, %p134
      %s136 = ssub.s32 %s18, %s25
      %p137 = scmp.eq.s32.totalorder %s136, 0
      %s139 = sadd.s32 %s138, 1
      %s140 = scalar_select %p137, %s138, %s139
      %p143 = pneg %p137
      %p144 = scmp.eq.s32.totalorder %s18, 1
      %p145 = por %p143, %p144
      %p146 = scmp.ne.s32.totalorder %s138, %s141
      %p147 = scmp.eq.s32.totalorder %s18, 0
      %p148 = por %p146, %p147
      %p149 = scmp.ne.s32.totalorder %s138, %s141
      %p150 = scmp.eq.s32.totalorder %s23, 1
      %p151 = por %p149, %p150
      %p152 = scmp.ne.s32.totalorder %s141, %s142
      %p153 = scmp.eq.s32.totalorder %s23, 0
      %p154 = por %p152, %p153
      %p155 = scmp.ne.s32.totalorder %s141, %s142
      %p156 = scmp.eq.s32.totalorder %s24, 1
      %p157 = por %p155, %p156
      %p159 = scmp.ne.s32.totalorder %s142, %s158
      %p160 = scmp.eq.s32.totalorder %s24, 0
      %p161 = por %p159, %p160
      %p162 = scmp.le.s32.totalorder 1, %s18
      %p163 = scmp.lt.s32.totalorder %s18, 3
      %p164 = pnand %p162, %p163
      %p165 = pneg %p164
      // Predicated region
      $region9: #{tpu_custom_call.1} parent=5 // pred_check
        _
      $region10: #{tpu_custom_call.1} parent=5 // pred_check_branch
        %167 = sbr.rel (%p164) target = $region12
      $region11: #{tpu_custom_call.1} parent=5 // pred_region
        %s168 = ssub.s32 %s18, 1
        // Predicated region
        $region13: #{tpu_custom_call.1} parent=11 // pred_check
          %p169 = pneg %p65
        $region14: #{tpu_custom_call.1} parent=11 // pred_check_branch
          %171 = sbr.rel (%p169) target = $region16
        $region15: #{tpu_custom_call.1} parent=11 // pred_region
          %s173 = ssub.s32 2048, 2048
          %174 = vsyncadd [#allocation6], %s173
          %s175 = sshll.u32 [#allocation5], 4
          %s176 = int_to_ptr.vmem [resolvable:$true] %s175
          %181 = dma.hbm_to_vmem [thread:$0]  %s1, 2048, %s176, [#allocation6], 64, 64, 4
        $region16: #{tpu_custom_call.1} parent=11 // pred_fallthru
          _
        // Predicated region
        $region17: #{tpu_custom_call.1} parent=11 // pred_check
          %p182 = pneg %p86
        $region18: #{tpu_custom_call.1} parent=11 // pred_check_branch
          %184 = sbr.rel (%p182) target = $region20
        $region19: #{tpu_custom_call.1} parent=11 // pred_region
          _
        $region20: #{tpu_custom_call.1} parent=11 // pred_fallthru
          _
        // Predicated region
        $region21: #{tpu_custom_call.1} parent=11 // pred_check
          %p185 = pneg %p107
        $region22: #{tpu_custom_call.1} parent=11 // pred_check_branch
          %187 = sbr.rel (%p185) target = $region24
        $region23: #{tpu_custom_call.1} parent=11 // pred_region
          %s189 = ssub.s32 1024, 1024
          %190 = vsyncadd [#allocation6], %s189
          %s191 = sshll.u32 [#allocation7], 4
          %s192 = int_to_ptr.vmem [resolvable:$true] %s191
          %197 = dma.hbm_to_vmem [thread:$0]  %s3, 1024, %s192, [#allocation6], 64, 64, 4
        $region24: #{tpu_custom_call.1} parent=11 // pred_fallthru
          _
        // Predicated region
        $region25: #{tpu_custom_call.1} parent=11 // pred_check
          %p198 = pneg %p128
        $region26: #{tpu_custom_call.1} parent=11 // pred_check_branch
          %200 = sbr.rel (%p198) target = $region28
        $region27: #{tpu_custom_call.1} parent=11 // pred_region
          _
        $region28: #{tpu_custom_call.1} parent=11 // pred_fallthru
          _
      $region12: #{tpu_custom_call.1} parent=5 // pred_fallthru
        _
      %p201 = scmp.lt.s32.totalorder %s18, 2
      // Predicated region
      $region29: #{tpu_custom_call.1} parent=5 // pred_check
        %p202 = pneg %p201
      $region30: #{tpu_custom_call.1} parent=5 // pred_check_branch
        %204 = sbr.rel (%p202) target = $region32
      $region31: #{tpu_custom_call.1} parent=5 // pred_region
        // Predicated region
        $region33: #{tpu_custom_call.1} parent=31 // pred_check
          %p205 = pneg %p38
        $region34: #{tpu_custom_call.1} parent=31 // pred_check_branch
          %207 = sbr.rel (%p205) target = $region36
        $region35: #{tpu_custom_call.1} parent=31 // pred_region
          %s208 = sand.u32 %s28, 1
          %s209 = scalar_lea.sflag [#allocation3], %s208
          %s210 = sand.u32 %s28, 1
          %s211 = smul.addr %s210, 4
          %s212 = scalar_lea.vmem [#allocation2], %s211
          %s214 = ssub.s32 64, 64
          %215 = vsyncadd %s209, %s214
          %s216 = smul.addr %s18, 64
          %s217 = scalar_lea.hbm %s0, %s216
          %s219 = sshll.u32 %s212, 4
          %s220 = int_to_ptr.vmem [resolvable:$true] %s219
          %222 = dma.hbm_to_vmem [thread:$0]  %s217, 64, %s220, %s209
        $region36: #{tpu_custom_call.1} parent=31 // pred_fallthru
          _
      $region32: #{tpu_custom_call.1} parent=5 // pred_fallthru
        _
      %p223 = scmp.le.s32.totalorder 1, %s18
      %p224 = scmp.lt.s32.totalorder %s18, 3
      %p225 = pnand %p223, %p224
      %p226 = pneg %p225
      // Predicated region
      $region37: #{tpu_custom_call.1} parent=5 // pred_check
        _
      $region38: #{tpu_custom_call.1} parent=5 // pred_check_branch
        %228 = sbr.rel (%p225) target = $region40
      $region39: #{tpu_custom_call.1} parent=5 // pred_region
        %s229 = ssub.s32 %s18, 1
        %s230 = sand.u32 %s31, 1
        %s231 = scalar_lea.sflag [#allocation3], %s230
        %s232 = sand.u32 %s31, 1
        %s233 = smul.addr %s232, 4
        %s234 = scalar_lea.vmem [#allocation2], %s233
        // Predicated region
        $region41: #{tpu_custom_call.1} parent=39 // pred_check
          %p235 = pneg %p44
        $region42: #{tpu_custom_call.1} parent=39 // pred_check_branch
          %237 = sbr.rel (%p235) target = $region44
        $region43: #{tpu_custom_call.1} parent=39 // pred_region
          %238 = dma.done %s231, 64
        $region44: #{tpu_custom_call.1} parent=39 // pred_fallthru
          _
        // Predicated region
        $region45: #{tpu_custom_call.1} parent=39 // pred_check
          %p239 = pneg %p65
        $region46: #{tpu_custom_call.1} parent=39 // pred_check_branch
          %241 = sbr.rel (%p239) target = $region48
        $region47: #{tpu_custom_call.1} parent=39 // pred_region
          %242 = dma.done [#allocation6], 2048
        $region48: #{tpu_custom_call.1} parent=39 // pred_fallthru
          _
        // Predicated region
        $region49: #{tpu_custom_call.1} parent=39 // pred_check
          %p243 = pneg %p107
        $region50: #{tpu_custom_call.1} parent=39 // pred_check_branch
          %245 = sbr.rel (%p243) target = $region52
        $region51: #{tpu_custom_call.1} parent=39 // pred_region
          %246 = dma.done [#allocation6], 1024
        $region52: #{tpu_custom_call.1} parent=39 // pred_fallthru
          _
        %s247 = sand.u32 %s31, 1
        %s248 = scalar_lea.sflag [#allocation3], %s247
        %s249 = sand.u32 %s31, 1
        %s250 = smul.addr %s249, 4
        %s251 = scalar_lea.vmem [#allocation2], %s250
        %p252 = pneg %p44
        %p253 = pneg %p41
        %p254 = pneg %p65
        %p255 = pneg %p62
        %p256 = pneg %p86
        %p257 = pneg %p83
        %p258 = pneg %p107
        %p259 = pneg %p104
        %p260 = pneg %p128
        %p261 = pneg %p125
        %p262 = pneg %p154
        %p263 = pneg %p151
        %s264 = sand.u32 %s141, 1
        %s265 = scalar_lea.sflag [#allocation4], %s264
        %s266 = sand.u32 %s141, 1
        %s267 = smul.addr %s266, 8
        %s268 = scalar_lea.vmem [#allocation8], %s267
        %v270 = vld [vmem:[%s234] sm:$0xf]
        %v271 = vld [vmem:[#allocation5] sm:$0xf]
        %v272 = vld [vmem:[#allocation5 + $0x4] sm:$0xf]
        %v273 = vld [vmem:[#allocation5 + $0x8] sm:$0xf]
        %v274 = vld [vmem:[#allocation5 + $0xc] sm:$0xf]
        %v275 = vld [vmem:[#allocation5 + $0x10] sm:$0xf]
        %v276 = vld [vmem:[#allocation5 + $0x14] sm:$0xf]
        %v277 = vld [vmem:[#allocation5 + $0x18] sm:$0xf]
        %v278 = vld [vmem:[#allocation5 + $0x1c] sm:$0xf]
        %v279 = vld [vmem:[#allocation5 + $0x20] sm:$0xf]
        %v280 = vld [vmem:[#allocation5 + $0x24] sm:$0xf]
        %v281 = vld [vmem:[#allocation5 + $0x28] sm:$0xf]
        %v282 = vld [vmem:[#allocation5 + $0x2c] sm:$0xf]
        %v283 = vld [vmem:[#allocation5 + $0x30] sm:$0xf]
        %v284 = vld [vmem:[#allocation5 + $0x34] sm:$0xf]
        %v285 = vld [vmem:[#allocation5 + $0x38] sm:$0xf]
        %v286 = vld [vmem:[#allocation5 + $0x3c] sm:$0xf]
        %v287 = vld [vmem:[%s2] sm:$0x1]
        %v288 = vlaneseq
        %v289 = vshrl.u32 %v288, 7
        %v290 = vsub.s32 0, %v289
        %v291 = vrot.slane %v287, %v290
        %v308 = vunpack.c.l.b16 %v271
        %v309 = vunpack.c.l.b16 %v272
        %v310 = vunpack.c.l.b16 %v273
        %v311 = vunpack.c.l.b16 %v274
        %v312 = vunpack.c.l.b16 %v275
        %v313 = vunpack.c.l.b16 %v276
        %v314 = vunpack.c.l.b16 %v277
        %v315 = vunpack.c.l.b16 %v278
        %v316 = vunpack.c.l.b16 %v279
        %v317 = vunpack.c.l.b16 %v280
        %v318 = vunpack.c.l.b16 %v281
        %v319 = vunpack.c.l.b16 %v282
        %v320 = vunpack.c.l.b16 %v283
        %v321 = vunpack.c.l.b16 %v284
        %v322 = vunpack.c.l.b16 %v285
        %v323 = vunpack.c.l.b16 %v286
        %v324 = vpack.c.b16 %v309, %v308
        %v325 = vpack.c.b16 %v311, %v310
        %v326 = vpack.c.b16 %v313, %v312
        %v327 = vpack.c.b16 %v315, %v314
        %v328 = vpack.c.b16 %v317, %v316
        %v329 = vpack.c.b16 %v319, %v318
        %v330 = vpack.c.b16 %v321, %v320
        %v331 = vpack.c.b16 %v323, %v322
        %340 = vmatprep.subr.bf16.mxu0 0
        %341 = vmatpush1.bf16.msra.mxu0 %v324
        %342 = vmatprep.subr.bf16.mxu0 0
        %343 = vmatpush1.bf16.msra.mxu0 %v325
        %344 = vmatprep.subr.bf16.mxu0 0
        %345 = vmatpush1.bf16.msra.mxu0 %v326
        %346 = vmatprep.subr.bf16.mxu0 0
        %347 = vmatpush1.bf16.msra.mxu0 %v327
        %348 = vmatprep.subr.bf16.mxu0 0
        %349 = vmatpush1.bf16.msra.mxu0 %v328
        %350 = vmatprep.subr.bf16.mxu0 0
        %351 = vmatpush1.bf16.msra.mxu0 %v329
        %352 = vmatprep.subr.bf16.mxu0 0
        %353 = vmatpush1.bf16.msra.mxu0 %v330
        %354 = vmatprep.subr.bf16.mxu0 0
        %355 = vmatpush1.bf16.msra.mxu0 %v331
        %356 = vmatprep.subr.bf16.mxu0 0
        %357 = vmatpush1.bf16.msra.mxu0 0
        %358 = vmatprep.subr.bf16.mxu0 0
        %359 = vmatpush1.bf16.msra.mxu0 0
        %360 = vmatprep.subr.bf16.mxu0 0
        %361 = vmatpush1.bf16.msra.mxu0 0
        %362 = vmatprep.subr.bf16.mxu0 0
        %363 = vmatpush1.bf16.msra.mxu0 0
        %364 = vmatprep.subr.bf16.mxu0 0
        %365 = vmatpush1.bf16.msra.mxu0 0
        %366 = vmatprep.subr.bf16.mxu0 0
        %367 = vmatpush1.bf16.msra.mxu0 0
        %368 = vmatprep.subr.bf16.mxu0 0
        %369 = vmatpush1.bf16.msra.mxu0 0
        %370 = vmatprep.subr.bf16.mxu0 0
        %371 = vmatpush1.bf16.msra.mxu0 0
        %372 = vmatprep.mubr.bf16.mxu0 0
        %373 = vmatmul.mubr.bf16.gmra.mrb[0].mxu0 %v270
        %v374 = vpop.f32.mrb[0].mxu0
        %v375 = vadd.f32 %v291, %v374
        %v376 = vpop.f32.mrb[0].mxu0
        %v377 = vpop.f32.mrb[0].mxu0
        %v378 = vpop.f32.mrb[0].mxu0
        %379 = vdwg.mxu0
        %v380 = vmax.f32 %v375, 0.0
        %v381 = vpack.c.bf16 %v380, %v380
        %s382 = scalar_lea.vmem [#allocation5], 64
        %v383 = vld [vmem:[%s382] sm:$0xf]
        %v384 = vld [vmem:[%s382 + $0x4] sm:$0xf]
        %v385 = vld [vmem:[%s382 + $0x8] sm:$0xf]
        %v386 = vld [vmem:[%s382 + $0xc] sm:$0xf]
        %v387 = vld [vmem:[%s382 + $0x10] sm:$0xf]
        %v388 = vld [vmem:[%s382 + $0x14] sm:$0xf]
        %v389 = vld [vmem:[%s382 + $0x18] sm:$0xf]
        %v390 = vld [vmem:[%s382 + $0x1c] sm:$0xf]
        %v391 = vld [vmem:[%s382 + $0x20] sm:$0xf]
        %v392 = vld [vmem:[%s382 + $0x24] sm:$0xf]
        %v393 = vld [vmem:[%s382 + $0x28] sm:$0xf]
        %v394 = vld [vmem:[%s382 + $0x2c] sm:$0xf]
        %v395 = vld [vmem:[%s382 + $0x30] sm:$0xf]
        %v396 = vld [vmem:[%s382 + $0x34] sm:$0xf]
        %v397 = vld [vmem:[%s382 + $0x38] sm:$0xf]
        %v398 = vld [vmem:[%s382 + $0x3c] sm:$0xf]
        %v399 = vld [vmem:[%s2 + $0x1] sm:$0x1]
        %v400 = vlaneseq
        %v401 = vshrl.u32 %v400, 7
        %v402 = vsub.s32 0, %v401
        %v403 = vrot.slane %v399, %v402
        %v420 = vunpack.c.l.b16 %v383
        %v421 = vunpack.c.l.b16 %v384
        %v422 = vunpack.c.l.b16 %v385
        %v423 = vunpack.c.l.b16 %v386
        %v424 = vunpack.c.l.b16 %v387
        %v425 = vunpack.c.l.b16 %v388
        %v426 = vunpack.c.l.b16 %v389
        %v427 = vunpack.c.l.b16 %v390
        %v428 = vunpack.c.l.b16 %v391
        %v429 = vunpack.c.l.b16 %v392
        %v430 = vunpack.c.l.b16 %v393
        %v431 = vunpack.c.l.b16 %v394
        %v432 = vunpack.c.l.b16 %v395
        %v433 = vunpack.c.l.b16 %v396
        %v434 = vunpack.c.l.b16 %v397
        %v435 = vunpack.c.l.b16 %v398
        %v436 = vpack.c.b16 %v421, %v420
        %v437 = vpack.c.b16 %v423, %v422
        %v438 = vpack.c.b16 %v425, %v424
        %v439 = vpack.c.b16 %v427, %v426
        %v440 = vpack.c.b16 %v429, %v428
        %v441 = vpack.c.b16 %v431, %v430
        %v442 = vpack.c.b16 %v433, %v432
        %v443 = vpack.c.b16 %v435, %v434
        %452 = vmatprep.subr.bf16.mxu0 0
        %453 = vmatpush1.bf16.msra.mxu0 %v436
        %454 = vmatprep.subr.bf16.mxu0 0
        %455 = vmatpush1.bf16.msra.mxu0 %v437
        %456 = vmatprep.subr.bf16.mxu0 0
        %457 = vmatpush1.bf16.msra.mxu0 %v438
        %458 = vmatprep.subr.bf16.mxu0 0
        %459 = vmatpush1.bf16.msra.mxu0 %v439
        %460 = vmatprep.subr.bf16.mxu0 0
        %461 = vmatpush1.bf16.msra.mxu0 %v440
        %462 = vmatprep.subr.bf16.mxu0 0
        %463 = vmatpush1.bf16.msra.mxu0 %v441
        %464 = vmatprep.subr.bf16.mxu0 0
        %465 = vmatpush1.bf16.msra.mxu0 %v442
        %466 = vmatprep.subr.bf16.mxu0 0
        %467 = vmatpush1.bf16.msra.mxu0 %v443
        %468 = vmatprep.subr.bf16.mxu0 0
        %469 = vmatpush1.bf16.msra.mxu0 0
        %470 = vmatprep.subr.bf16.mxu0 0
        %471 = vmatpush1.bf16.msra.mxu0 0
        %472 = vmatprep.subr.bf16.mxu0 0
        %473 = vmatpush1.bf16.msra.mxu0 0
        %474 = vmatprep.subr.bf16.mxu0 0
        %475 = vmatpush1.bf16.msra.mxu0 0
        %476 = vmatprep.subr.bf16.mxu0 0
        %477 = vmatpush1.bf16.msra.mxu0 0
        %478 = vmatprep.subr.bf16.mxu0 0
        %479 = vmatpush1.bf16.msra.mxu0 0
        %480 = vmatprep.subr.bf16.mxu0 0
        %481 = vmatpush1.bf16.msra.mxu0 0
        %482 = vmatprep.subr.bf16.mxu0 0
        %483 = vmatpush1.bf16.msra.mxu0 0
        %484 = vmatprep.mubr.bf16.mxu0 0
        %485 = vmatmul.mubr.bf16.gmra.mrb[0].mxu0 %v381
        %v486 = vpop.f32.mrb[0].mxu0
        %v487 = vadd.f32 %v403, %v486
        %v488 = vpop.f32.mrb[0].mxu0
        %v489 = vpop.f32.mrb[0].mxu0
        %v490 = vpop.f32.mrb[0].mxu0
        %491 = vdwg.mxu0
        %v492 = vmax.f32 %v487, 0.0
        %v493 = vpack.c.bf16 %v492, %v492
        %v494 = vld [vmem:[#allocation7] sm:$0xf]
        %v495 = vld [vmem:[#allocation7 + $0x4] sm:$0xf]
        %v496 = vld [vmem:[#allocation7 + $0x8] sm:$0xf]
        %v497 = vld [vmem:[#allocation7 + $0xc] sm:$0xf]
        %v498 = vld [vmem:[#allocation7 + $0x10] sm:$0xf]
        %v499 = vld [vmem:[#allocation7 + $0x14] sm:$0xf]
        %v500 = vld [vmem:[#allocation7 + $0x18] sm:$0xf]
        %v501 = vld [vmem:[#allocation7 + $0x1c] sm:$0xf]
        %v502 = vld [vmem:[#allocation7 + $0x20] sm:$0xf]
        %v503 = vld [vmem:[#allocation7 + $0x24] sm:$0xf]
        %v504 = vld [vmem:[#allocation7 + $0x28] sm:$0xf]
        %v505 = vld [vmem:[#allocation7 + $0x2c] sm:$0xf]
        %v506 = vld [vmem:[#allocation7 + $0x30] sm:$0xf]
        %v507 = vld [vmem:[#allocation7 + $0x34] sm:$0xf]
        %v508 = vld [vmem:[#allocation7 + $0x38] sm:$0xf]
        %v509 = vld [vmem:[#allocation7 + $0x3c] sm:$0xf]
        %v510 = vld [vmem:[%s4] sm:$0x1]
        %v512 = vlaneseq
        %v513 = vshrl.u32 %v512, 7
        %v514 = vsub.s32 0, %v513
        %v515 = vrot.slane %v510, %v514
        %v533 = vunpack.c.l.b16 %v494
        %v534 = vunpack.c.l.b16 %v495
        %v535 = vunpack.c.l.b16 %v496
        %v536 = vunpack.c.l.b16 %v497
        %v537 = vunpack.c.l.b16 %v498
        %v538 = vunpack.c.l.b16 %v499
        %v539 = vunpack.c.l.b16 %v500
        %v540 = vunpack.c.l.b16 %v501
        %v541 = vunpack.c.l.b16 %v502
        %v542 = vunpack.c.l.b16 %v503
        %v543 = vunpack.c.l.b16 %v504
        %v544 = vunpack.c.l.b16 %v505
        %v545 = vunpack.c.l.b16 %v506
        %v546 = vunpack.c.l.b16 %v507
        %v547 = vunpack.c.l.b16 %v508
        %v548 = vunpack.c.l.b16 %v509
        %v549 = vpack.c.b16 %v534, %v533
        %v550 = vpack.c.b16 %v536, %v535
        %v551 = vpack.c.b16 %v538, %v537
        %v552 = vpack.c.b16 %v540, %v539
        %v553 = vpack.c.b16 %v542, %v541
        %v554 = vpack.c.b16 %v544, %v543
        %v555 = vpack.c.b16 %v546, %v545
        %v556 = vpack.c.b16 %v548, %v547
        %565 = vmatprep.subr.bf16.mxu0 0
        %566 = vmatpush1.bf16.msra.mxu0 %v549
        %567 = vmatprep.subr.bf16.mxu0 0
        %568 = vmatpush1.bf16.msra.mxu0 %v550
        %569 = vmatprep.subr.bf16.mxu0 0
        %570 = vmatpush1.bf16.msra.mxu0 %v551
        %571 = vmatprep.subr.bf16.mxu0 0
        %572 = vmatpush1.bf16.msra.mxu0 %v552
        %573 = vmatprep.subr.bf16.mxu0 0
        %574 = vmatpush1.bf16.msra.mxu0 %v553
        %575 = vmatprep.subr.bf16.mxu0 0
        %576 = vmatpush1.bf16.msra.mxu0 %v554
        %577 = vmatprep.subr.bf16.mxu0 0
        %578 = vmatpush1.bf16.msra.mxu0 %v555
        %579 = vmatprep.subr.bf16.mxu0 0
        %580 = vmatpush1.bf16.msra.mxu0 %v556
        %581 = vmatprep.subr.bf16.mxu0 0
        %582 = vmatpush1.bf16.msra.mxu0 0
        %583 = vmatprep.subr.bf16.mxu0 0
        %584 = vmatpush1.bf16.msra.mxu0 0
        %585 = vmatprep.subr.bf16.mxu0 0
        %586 = vmatpush1.bf16.msra.mxu0 0
        %587 = vmatprep.subr.bf16.mxu0 0
        %588 = vmatpush1.bf16.msra.mxu0 0
        %589 = vmatprep.subr.bf16.mxu0 0
        %590 = vmatpush1.bf16.msra.mxu0 0
        %591 = vmatprep.subr.bf16.mxu0 0
        %592 = vmatpush1.bf16.msra.mxu0 0
        %593 = vmatprep.subr.bf16.mxu0 0
        %594 = vmatpush1.bf16.msra.mxu0 0
        %595 = vmatprep.subr.bf16.mxu0 0
        %596 = vmatpush1.bf16.msra.mxu0 0
        %597 = vmatprep.mubr.bf16.mxu0 0
        %598 = vmatmul.mubr.bf16.gmra.mrb[0].mxu0 %v493
        %v599 = vpop.f32.mrb[0].mxu0
        %v600 = vadd.f32 %v515, %v599
        %v601 = vpop.f32.mrb[0].mxu0
        %v602 = vpop.f32.mrb[0].mxu0
        %v603 = vpop.f32.mrb[0].mxu0
        %604 = vdwg.mxu0
        %605 = vst [vmem:[%s268] sm:$0xff] %v600
        %s606 = sand.u32 %s141, 1
        %s607 = scalar_lea.sflag [#allocation4], %s606
        %s608 = sand.u32 %s141, 1
        %s609 = smul.addr %s608, 8
        %s610 = scalar_lea.vmem [#allocation8], %s609
        // Predicated region
        $region53: #{tpu_custom_call.1} parent=39 // pred_check
          %p611 = pneg %p151
        $region54: #{tpu_custom_call.1} parent=39 // pred_check_branch
          %613 = sbr.rel (%p611) target = $region56
        $region55: #{tpu_custom_call.1} parent=39 // pred_region
          %s615 = ssub.s32 128, 128
          %616 = vsyncadd %s607, %s615
          %s617 = smul.addr %s23, 128
          %s618 = scalar_lea.hbm %s5, %s617
          %s620 = sshll.u32 %s610, 4
          %s621 = int_to_ptr.vmem [resolvable:$true] %s620
          %623 = dma.vmem_to_hbm [thread:$0]  %s621, 128, %s618, %s607
        $region56: #{tpu_custom_call.1} parent=39 // pred_fallthru
          _
      $region40: #{tpu_custom_call.1} parent=5 // pred_fallthru
        _
      %p624 = scmp.le.s32.totalorder 2, %s18
      // Predicated region
      $region57: #{tpu_custom_call.1} parent=5 // pred_check
        %p625 = pneg %p624
      $region58: #{tpu_custom_call.1} parent=5 // pred_check_branch
        %627 = sbr.rel (%p625) target = $region60
      $region59: #{tpu_custom_call.1} parent=5 // pred_region
        %s628 = ssub.s32 %s18, 2
        // Predicated region
        $region61: #{tpu_custom_call.1} parent=59 // pred_check
          %p629 = pneg %p157
        $region62: #{tpu_custom_call.1} parent=59 // pred_check_branch
          %631 = sbr.rel (%p629) target = $region64
        $region63: #{tpu_custom_call.1} parent=59 // pred_region
          %s632 = sand.u32 %s142, 1
          %s633 = scalar_lea.sflag [#allocation4], %s632
          %s634 = sand.u32 %s142, 1
          %s635 = smul.addr %s634, 8
          %s636 = scalar_lea.vmem [#allocation8], %s635
          %637 = dma.done %s633, 128
        $region64: #{tpu_custom_call.1} parent=59 // pred_fallthru
          _
      $region60: #{tpu_custom_call.1} parent=5 // pred_fallthru
        _
    $region6: #{tpu_custom_call.1} parent=1 // loop_footer
      %s22 = sadd.s32 1, %s18
    $region7: #{tpu_custom_call.1} parent=1 // loop_footer_branch
      %17 = sbr.rel target = $region3
    $region8: #{tpu_custom_call.1} parent=1 // loop_exit
      _
    %638 = vsyncpa [#allocation3], 1
    %s639 = scalar_lea.sflag [#allocation3], 1
    %640 = vsyncpa %s639, 1
    %641 = vsyncpa [#allocation6], 1
    %642 = vsyncpa [#allocation4], 1
    %s643 = scalar_lea.sflag [#allocation4], 1
    %644 = vsyncpa %s643, 1

</llo_original>
